<compile_context>
chip_gen: v5e
topology: v5e:2x2
jax: 0.10.0
libtpu: 0.0.40
codegen_flags: <defaults>
</compile_context>

<pallas_src>
import functools

import jax
import jax.numpy as jnp
from jax.experimental import pallas as pl
from jax.experimental.pallas import tpu as pltpu

_LANE = 128


def _row_tile(H, W):
    """Rows per accumulator tile: keep acc (+ one tap slice) within ~32 vregs."""
    sub_per_row = -(-W // 8)                       # ceil(W/8) vregs per row at TC=128
    return max(1, min(H, 16 // max(1, sub_per_row)))


def _ppeg_kernel(x_ref, w_ref, b_ref, out_ref, xpad_ref, xcol_ref, *, H, W, TH):
    # x_ref, out_ref: (1, 1 + H*W, TC) token blocks (cls token at row 0).
    # w_ref:  (7, 7, TC) merged depthwise weight;  b_ref: (1, 1, TC) summed bias.
    # xpad_ref: (H+6, W+6, TC) pad-3 spatial scratch (input dtype).
    # xcol_ref: (TH+6, W, TC)  per-kx column staging scratch (input dtype).
    TC = x_ref.shape[-1]

    # cls token passes straight through (folds the wrapper concat away).
    out_ref[0, 0:1, :] = x_ref[0, 0:1, :]

    # Zero only the 3-wide border strips; the interior is overwritten below.
    # Runs every step, so it is correct however the parallel grid axes are
    # sharded across TensorCores (scratch is per-core).
    zdt = xpad_ref.dtype
    xpad_ref[0:3, :, :] = jnp.zeros((3, W + 6, TC), zdt)
    xpad_ref[3 + H:3 + H + 3, :, :] = jnp.zeros((3, W + 6, TC), zdt)
    xpad_ref[3:3 + H, 0:3, :] = jnp.zeros((H, 3, TC), zdt)
    xpad_ref[3:3 + H, 3 + W:3 + W + 3, :] = jnp.zeros((H, 3, TC), zdt)

    # Scatter the feature tokens (row-major) into the padded spatial buffer.
    # TODO(synk): on v7x, DMA these rows straight into xpad_ref via
    # memory_space=pl.ANY + pltpu.make_async_copy to drop this VMEM->VMEM pass.
    for h in range(H):
        xpad_ref[3 + h, 3:3 + W, :] = x_ref[0, 1 + h * W:1 + (h + 1) * W, :]

    bias = b_ref[...].astype(jnp.float32)                       # (1, 1, TC)

    # Row-tiled merged 7x7 depthwise conv. The (th, W, TC) f32 accumulator for
    # each tile stays in registers across all 49 taps; per kx the unaligned
    # sublane slice is staged once through xcol_ref so the inner ky loads are
    # aligned major-axis slices (vld traffic, not register pressure).
    # TODO(synk): on v6e/v7x with bf16 activations, do the per-tap multiply in
    # packed bf16 and widen only for the f32 accumulate.
    for r0 in range(0, H, TH):
        th = min(TH, H - r0)
        acc = jnp.broadcast_to(bias, (th, W, TC))
        for kx in range(7):
            xcol_ref[0:th + 6, :, :] = xpad_ref[r0:r0 + th + 6, kx:kx + W, :]
            for ky in range(7):
                wt = w_ref[ky, kx, :].astype(jnp.float32)       # (TC,) tap weight
                acc = acc + xcol_ref[ky:ky + th, :, :].astype(jnp.float32) * wt
        acc = acc.astype(out_ref.dtype)
        for i in range(th):
            t0 = 1 + (r0 + i) * W
            out_ref[0, t0:t0 + W, :] = acc[i]


def ppeg_forward(x, H, W, params):
    """x: (B, 1 + H*W, C) tokens. Returns (B, 1 + H*W, C)."""
    B, N, C = x.shape
    assert N == 1 + H * W
    w7, w5, w3, b7, b5, b3 = params

    # --- Fold the three depthwise convs + identity into one 7x7 weight. -----
    w_eff = w7
    w_eff = w_eff.at[1:6, 1:6, :].add(w5)     # 5x5 sits at offset +1
    w_eff = w_eff.at[2:5, 2:5, :].add(w3)     # 3x3 sits at offset +2
    w_eff = w_eff.at[3, 3, :].add(1.0)        # identity / residual
    b_sum = b7 + b5 + b3

    # --- Lane-dense channels: pad C up to a multiple of 128. ----------------
    Cp = ((C + _LANE - 1) // _LANE) * _LANE
    xk = x
    if Cp != C:
        # TODO(synk): for tiny C (e.g. 32) pack several batch elements into the
        # unused lanes instead of zero-padding 75% of every vreg.
        pad_c = Cp - C
        xk = jnp.pad(x, ((0, 0), (0, 0), (0, pad_c)))
        w_eff = jnp.pad(w_eff, ((0, 0), (0, 0), (0, pad_c)))
        b_sum = jnp.pad(b_sum, ((0, pad_c),))
    b_sum = b_sum.reshape(1, 1, Cp)

    # Fixed 128-lane channel tile: keeps the per-tile working set register
    # resident and keeps the parallel grid (B, Cp//128) as large as possible.
    TC = _LANE
    TH = _row_tile(H, W)
    grid = (B, Cp // TC)

    itemsize = xk.dtype.itemsize
    est = (4 * N * TC * itemsize                         # in + out token blocks, 2x buffered
           + 2 * (7 * 8 + 8) * TC * w_eff.dtype.itemsize  # weight + bias blocks
           + (H + 6) * (W + 14) * TC * itemsize           # xpad (+ sublane pad slack)
           + (TH + 6) * (W + 8) * TC * itemsize)          # xcol staging scratch
    vmem_limit = int(min(32 * 1024 * 1024, max(16 * 1024 * 1024, 2 * est)))

    kernel = functools.partial(_ppeg_kernel, H=H, W=W, TH=TH)
    out = pl.pallas_call(
        kernel,
        out_shape=jax.ShapeDtypeStruct((B, N, Cp), x.dtype),
        grid=grid,
        in_specs=[
            pl.BlockSpec((1, N, TC), lambda b, c: (b, 0, c)),
            pl.BlockSpec((7, 7, TC), lambda b, c: (0, 0, c)),
            pl.BlockSpec((1, 1, TC), lambda b, c: (0, 0, c)),
        ],
        out_specs=pl.BlockSpec((1, N, TC), lambda b, c: (b, 0, c)),
        scratch_shapes=[
            pltpu.VMEM((H + 6, W + 6, TC), xk.dtype),
            pltpu.VMEM((TH + 6, W, TC), xk.dtype),
        ],
        compiler_params=pltpu.CompilerParams(
            dimension_semantics=("parallel", "parallel"),
            vmem_limit_bytes=vmem_limit),
    )(xk, w_eff, b_sum)

    if Cp != C:
        out = out[..., :C]
    return out


def ppeg_reference(x, H, W, params):
    """Pure-JAX reference using lax depthwise convs (for verification)."""
    B, N, C = x.shape
    w7, w5, w3, b7, b5, b3 = params
    cls_token = x[:, :1, :]
    feat = x[:, 1:, :].reshape(B, H, W, C)

    def dwconv(f, w, b):
        kh, kw, c = w.shape
        y = jax.lax.conv_general_dilated(
            f, w.reshape(kh, kw, 1, c),
            window_strides=(1, 1), padding="SAME",
            dimension_numbers=("NHWC", "HWIO", "NHWC"),
            feature_group_count=c)
        return y + b

    y = feat + dwconv(feat, w7, b7) + dwconv(feat, w5, b5) + dwconv(feat, w3, b3)
    return jnp.concatenate([cls_token, y.reshape(B, H * W, C)], axis=1)


if __name__ == "__main__":
    # Small shapes consistent with the module: dim (C) = 32, H = W = 4 spatial
    # tokens plus a cls token -> N = 17.
    B, C, H, W = 2, 32, 4, 4
    N = 1 + H * W

    key = jax.random.PRNGKey(0)
    kx_, k1, k2, k3, k4, k5, k6 = jax.random.split(key, 7)
    x = jax.random.normal(kx_, (B, N, C), jnp.float32)

    # Parameters stored channels-last ((kh, kw, C)) for the lane-dense kernel.
    w7 = jax.random.normal(k1, (7, 7, C), jnp.float32) * 0.05
    w5 = jax.random.normal(k2, (5, 5, C), jnp.float32) * 0.05
    w3 = jax.random.normal(k3, (3, 3, C), jnp.float32) * 0.05
    b7 = jax.random.normal(k4, (C,), jnp.float32) * 0.01
    b5 = jax.random.normal(k5, (C,), jnp.float32) * 0.01
    b3 = jax.random.normal(k6, (C,), jnp.float32) * 0.01
    params = (w7, w5, w3, b7, b5, b3)

    out = ppeg_forward(x, H, W, params)
    jax.block_until_ready(out)

    ref = ppeg_reference(x, H, W, params)
    assert out.shape == (B, N, C)
    assert jnp.allclose(out, ref, atol=1e-4, rtol=1e-4), "mismatch vs reference"

    print("KERNEL_OK")
</pallas_src>

<mosaic_0001>
module attributes {stable_mosaic.version = 11 : i64} {
  func.func @_ppeg_kernel(%arg0: i32, %arg1: i32, %arg2: memref<1x17x128xf32, #tpu.memory_space<vmem>>, %arg3: memref<7x7x128xf32, #tpu.memory_space<vmem>>, %arg4: memref<1x1x128xf32, #tpu.memory_space<vmem>>, %arg5: memref<1x17x128xf32, #tpu.memory_space<vmem>>, %arg6: memref<10x10x128xf32, #tpu.memory_space<vmem>>, %arg7: memref<10x4x128xf32, #tpu.memory_space<vmem>>) attributes {dimension_semantics = [#tpu.dimension_semantics<parallel>, #tpu.dimension_semantics<parallel>], iteration_bounds = array<i64: 2, 1>, scalar_prefetch = 0 : i64, scratch_operands = 2 : i64, tpu.core_type = #tpu.core_type<tc>, window_params = [{transform_indices = @transform_0, window_bounds = array<i64: 1, 17, 128>}, {transform_indices = @transform_1, window_bounds = array<i64: 7, 7, 128>}, {transform_indices = @transform_2, window_bounds = array<i64: 1, 1, 128>}, {transform_indices = @transform_3, window_bounds = array<i64: 1, 17, 128>}]} {
    %c0 = arith.constant 0 : index
    %c0_0 = arith.constant 0 : index
    %c0_1 = arith.constant 0 : index
    %0 = vector.load %arg2[%c0, %c0_0, %c0_1] : memref<1x17x128xf32, #tpu.memory_space<vmem>>, vector<1x1x128xf32>
    %1 = vector.shape_cast %0 : vector<1x1x128xf32> to vector<1x128xf32>
    %c0_2 = arith.constant 0 : index
    %c0_3 = arith.constant 0 : index
    %c0_4 = arith.constant 0 : index
    %2 = vector.load %arg5[%c0_2, %c0_3, %c0_4] : memref<1x17x128xf32, #tpu.memory_space<vmem>>, vector<1x1x128xf32>
    %3 = vector.shape_cast %2 : vector<1x1x128xf32> to vector<1x128xf32>
    %4 = vector.shape_cast %1 : vector<1x128xf32> to vector<1x1x128xf32>
    tpu.vector_store %arg5[%c0_2, %c0_3, %c0_4], %4 {strides = array<i32>} : memref<1x17x128xf32, #tpu.memory_space<vmem>>, vector<1x1x128xf32>,
    %cst = arith.constant 0.000000e+00 : f32
    %5 = vector.broadcast %cst : f32 to vector<3x10x128xf32>
    %c0_5 = arith.constant 0 : index
    %c0_6 = arith.constant 0 : index
    %c0_7 = arith.constant 0 : index
    %6 = vector.load %arg6[%c0_5, %c0_6, %c0_7] : memref<10x10x128xf32, #tpu.memory_space<vmem>>, vector<3x10x128xf32>
    tpu.vector_store %arg6[%c0_5, %c0_6, %c0_7], %5 {strides = array<i32>} : memref<10x10x128xf32, #tpu.memory_space<vmem>>, vector<3x10x128xf32>,
    %cst_8 = arith.constant 0.000000e+00 : f32
    %7 = vector.broadcast %cst_8 : f32 to vector<3x10x128xf32>
    %c7 = arith.constant 7 : index
    %c0_9 = arith.constant 0 : index
    %c0_10 = arith.constant 0 : index
    %8 = vector.load %arg6[%c7, %c0_9, %c0_10] : memref<10x10x128xf32, #tpu.memory_space<vmem>>, vector<3x10x128xf32>
    tpu.vector_store %arg6[%c7, %c0_9, %c0_10], %7 {strides = array<i32>} : memref<10x10x128xf32, #tpu.memory_space<vmem>>, vector<3x10x128xf32>,
    %cst_11 = arith.constant 0.000000e+00 : f32
    %9 = vector.broadcast %cst_11 : f32 to vector<4x3x128xf32>
    %c3 = arith.constant 3 : index
    %c0_12 = arith.constant 0 : index
    %c0_13 = arith.constant 0 : index
    %10 = vector.load %arg6[%c3, %c0_12, %c0_13] : memref<10x10x128xf32, #tpu.memory_space<vmem>>, vector<4x3x128xf32>
    tpu.vector_store %arg6[%c3, %c0_12, %c0_13], %9 {strides = array<i32>} : memref<10x10x128xf32, #tpu.memory_space<vmem>>, vector<4x3x128xf32>,
    %cst_14 = arith.constant 0.000000e+00 : f32
    %11 = vector.broadcast %cst_14 : f32 to vector<4x3x128xf32>
    %c3_15 = arith.constant 3 : index
    %c7_16 = arith.constant 7 : index
    %c0_17 = arith.constant 0 : index
    %12 = vector.load %arg6[%c3_15, %c7_16, %c0_17] : memref<10x10x128xf32, #tpu.memory_space<vmem>>, vector<4x3x128xf32>
    tpu.vector_store %arg6[%c3_15, %c7_16, %c0_17], %11 {strides = array<i32>} : memref<10x10x128xf32, #tpu.memory_space<vmem>>, vector<4x3x128xf32>,
    %c0_18 = arith.constant 0 : index
    %c1 = arith.constant 1 : index
    %c0_19 = arith.constant 0 : index
    %13 = vector.load %arg2[%c0_18, %c1, %c0_19] : memref<1x17x128xf32, #tpu.memory_space<vmem>>, vector<1x4x128xf32>
    %14 = vector.shape_cast %13 : vector<1x4x128xf32> to vector<4x128xf32>
    %c3_20 = arith.constant 3 : index
    %c3_21 = arith.constant 3 : index
    %c0_22 = arith.constant 0 : index
    %15 = vector.load %arg6[%c3_20, %c3_21, %c0_22] : memref<10x10x128xf32, #tpu.memory_space<vmem>>, vector<1x4x128xf32>
    %16 = vector.shape_cast %15 : vector<1x4x128xf32> to vector<4x128xf32>
    %17 = vector.shape_cast %14 : vector<4x128xf32> to vector<1x4x128xf32>
    tpu.vector_store %arg6[%c3_20, %c3_21, %c0_22], %17 {strides = array<i32>} : memref<10x10x128xf32, #tpu.memory_space<vmem>>, vector<1x4x128xf32>,
    %c0_23 = arith.constant 0 : index
    %c5 = arith.constant 5 : index
    %c0_24 = arith.constant 0 : index
    %18 = vector.load %arg2[%c0_23, %c5, %c0_24] : memref<1x17x128xf32, #tpu.memory_space<vmem>>, vector<1x4x128xf32>
    %19 = vector.shape_cast %18 : vector<1x4x128xf32> to vector<4x128xf32>
    %c4 = arith.constant 4 : index
    %c3_25 = arith.constant 3 : index
    %c0_26 = arith.constant 0 : index
    %20 = vector.load %arg6[%c4, %c3_25, %c0_26] : memref<10x10x128xf32, #tpu.memory_space<vmem>>, vector<1x4x128xf32>
    %21 = vector.shape_cast %20 : vector<1x4x128xf32> to vector<4x128xf32>
    %22 = vector.shape_cast %19 : vector<4x128xf32> to vector<1x4x128xf32>
    tpu.vector_store %arg6[%c4, %c3_25, %c0_26], %22 {strides = array<i32>} : memref<10x10x128xf32, #tpu.memory_space<vmem>>, vector<1x4x128xf32>,
    %c0_27 = arith.constant 0 : index
    %c9 = arith.constant 9 : index
    %c0_28 = arith.constant 0 : index
    %23 = vector.load %arg2[%c0_27, %c9, %c0_28] : memref<1x17x128xf32, #tpu.memory_space<vmem>>, vector<1x4x128xf32>
    %24 = vector.shape_cast %23 : vector<1x4x128xf32> to vector<4x128xf32>
    %c5_29 = arith.constant 5 : index
    %c3_30 = arith.constant 3 : index
    %c0_31 = arith.constant 0 : index
    %25 = vector.load %arg6[%c5_29, %c3_30, %c0_31] : memref<10x10x128xf32, #tpu.memory_space<vmem>>, vector<1x4x128xf32>
    %26 = vector.shape_cast %25 : vector<1x4x128xf32> to vector<4x128xf32>
    %27 = vector.shape_cast %24 : vector<4x128xf32> to vector<1x4x128xf32>
    tpu.vector_store %arg6[%c5_29, %c3_30, %c0_31], %27 {strides = array<i32>} : memref<10x10x128xf32, #tpu.memory_space<vmem>>, vector<1x4x128xf32>,
    %c0_32 = arith.constant 0 : index
    %c13 = arith.constant 13 : index
    %c0_33 = arith.constant 0 : index
    %28 = vector.load %arg2[%c0_32, %c13, %c0_33] : memref<1x17x128xf32, #tpu.memory_space<vmem>>, vector<1x4x128xf32>
    %29 = vector.shape_cast %28 : vector<1x4x128xf32> to vector<4x128xf32>
    %c6 = arith.constant 6 : index
    %c3_34 = arith.constant 3 : index
    %c0_35 = arith.constant 0 : index
    %30 = vector.load %arg6[%c6, %c3_34, %c0_35] : memref<10x10x128xf32, #tpu.memory_space<vmem>>, vector<1x4x128xf32>
    %31 = vector.shape_cast %30 : vector<1x4x128xf32> to vector<4x128xf32>
    %32 = vector.shape_cast %29 : vector<4x128xf32> to vector<1x4x128xf32>
    tpu.vector_store %arg6[%c6, %c3_34, %c0_35], %32 {strides = array<i32>} : memref<10x10x128xf32, #tpu.memory_space<vmem>>, vector<1x4x128xf32>,
    %c0_36 = arith.constant 0 : index
    %c0_37 = arith.constant 0 : index
    %c0_38 = arith.constant 0 : index
    %33 = vector.load %arg4[%c0_36, %c0_37, %c0_38] : memref<1x1x128xf32, #tpu.memory_space<vmem>>, vector<1x1x128xf32>
    %34 = vector.shape_cast %33 : vector<1x1x128xf32> to vector<1x1x128xf32>
    %35 = vector.broadcast %34 : vector<1x1x128xf32> to vector<4x4x128xf32>
    %c0_39 = arith.constant 0 : index
    %c0_40 = arith.constant 0 : index
    %c0_41 = arith.constant 0 : index
    %36 = vector.load %arg6[%c0_39, %c0_40, %c0_41] : memref<10x10x128xf32, #tpu.memory_space<vmem>>, vector<10x4x128xf32>
    %c0_42 = arith.constant 0 : index
    %c0_43 = arith.constant 0 : index
    %c0_44 = arith.constant 0 : index
    %37 = vector.load %arg7[%c0_42, %c0_43, %c0_44] : memref<10x4x128xf32, #tpu.memory_space<vmem>>, vector<10x4x128xf32>
    tpu.vector_store %arg7[%c0_42, %c0_43, %c0_44], %36 {strides = array<i32>} : memref<10x4x128xf32, #tpu.memory_space<vmem>>, vector<10x4x128xf32>,
    %c0_45 = arith.constant 0 : index
    %c0_46 = arith.constant 0 : index
    %c0_47 = arith.constant 0 : index
    %38 = vector.load %arg3[%c0_45, %c0_46, %c0_47] : memref<7x7x128xf32, #tpu.memory_space<vmem>>, vector<1x1x128xf32>
    %39 = vector.shape_cast %38 : vector<1x1x128xf32> to vector<128xf32>
    %c0_48 = arith.constant 0 : index
    %c0_49 = arith.constant 0 : index
    %c0_50 = arith.constant 0 : index
    %40 = vector.load %arg7[%c0_48, %c0_49, %c0_50] : memref<10x4x128xf32, #tpu.memory_space<vmem>>, vector<4x4x128xf32>
    %41 = vector.shape_cast %39 : vector<128xf32> to vector<1x1x128xf32>
    %42 = vector.broadcast %41 : vector<1x1x128xf32> to vector<4x4x128xf32>
    %43 = arith.mulf %40, %42 : vector<4x4x128xf32>
    %44 = arith.addf %35, %43 : vector<4x4x128xf32>
    %c1_51 = arith.constant 1 : index
    %c0_52 = arith.constant 0 : index
    %c0_53 = arith.constant 0 : index
    %45 = vector.load %arg3[%c1_51, %c0_52, %c0_53] : memref<7x7x128xf32, #tpu.memory_space<vmem>>, vector<1x1x128xf32>
    %46 = vector.shape_cast %45 : vector<1x1x128xf32> to vector<128xf32>
    %c1_54 = arith.constant 1 : index
    %c0_55 = arith.constant 0 : index
    %c0_56 = arith.constant 0 : index
    %47 = vector.load %arg7[%c1_54, %c0_55, %c0_56] : memref<10x4x128xf32, #tpu.memory_space<vmem>>, vector<4x4x128xf32>
    %48 = vector.shape_cast %46 : vector<128xf32> to vector<1x1x128xf32>
    %49 = vector.broadcast %48 : vector<1x1x128xf32> to vector<4x4x128xf32>
    %50 = arith.mulf %47, %49 : vector<4x4x128xf32>
    %51 = arith.addf %44, %50 : vector<4x4x128xf32>
    %c2 = arith.constant 2 : index
    %c0_57 = arith.constant 0 : index
    %c0_58 = arith.constant 0 : index
    %52 = vector.load %arg3[%c2, %c0_57, %c0_58] : memref<7x7x128xf32, #tpu.memory_space<vmem>>, vector<1x1x128xf32>
    %53 = vector.shape_cast %52 : vector<1x1x128xf32> to vector<128xf32>
    %c2_59 = arith.constant 2 : index
    %c0_60 = arith.constant 0 : index
    %c0_61 = arith.constant 0 : index
    %54 = vector.load %arg7[%c2_59, %c0_60, %c0_61] : memref<10x4x128xf32, #tpu.memory_space<vmem>>, vector<4x4x128xf32>
    %55 = vector.shape_cast %53 : vector<128xf32> to vector<1x1x128xf32>
    %56 = vector.broadcast %55 : vector<1x1x128xf32> to vector<4x4x128xf32>
    %57 = arith.mulf %54, %56 : vector<4x4x128xf32>
    %58 = arith.addf %51, %57 : vector<4x4x128xf32>
    %c3_62 = arith.constant 3 : index
    %c0_63 = arith.constant 0 : index
    %c0_64 = arith.constant 0 : index
    %59 = vector.load %arg3[%c3_62, %c0_63, %c0_64] : memref<7x7x128xf32, #tpu.memory_space<vmem>>, vector<1x1x128xf32>
    %60 = vector.shape_cast %59 : vector<1x1x128xf32> to vector<128xf32>
    %c3_65 = arith.constant 3 : index
    %c0_66 = arith.constant 0 : index
    %c0_67 = arith.constant 0 : index
    %61 = vector.load %arg7[%c3_65, %c0_66, %c0_67] : memref<10x4x128xf32, #tpu.memory_space<vmem>>, vector<4x4x128xf32>
    %62 = vector.shape_cast %60 : vector<128xf32> to vector<1x1x128xf32>
    %63 = vector.broadcast %62 : vector<1x1x128xf32> to vector<4x4x128xf32>
    %64 = arith.mulf %61, %63 : vector<4x4x128xf32>
    %65 = arith.addf %58, %64 : vector<4x4x128xf32>
    %c4_68 = arith.constant 4 : index
    %c0_69 = arith.constant 0 : index
    %c0_70 = arith.constant 0 : index
    %66 = vector.load %arg3[%c4_68, %c0_69, %c0_70] : memref<7x7x128xf32, #tpu.memory_space<vmem>>, vector<1x1x128xf32>
    %67 = vector.shape_cast %66 : vector<1x1x128xf32> to vector<128xf32>
    %c4_71 = arith.constant 4 : index
    %c0_72 = arith.constant 0 : index
    %c0_73 = arith.constant 0 : index
    %68 = vector.load %arg7[%c4_71, %c0_72, %c0_73] : memref<10x4x128xf32, #tpu.memory_space<vmem>>, vector<4x4x128xf32>
    %69 = vector.shape_cast %67 : vector<128xf32> to vector<1x1x128xf32>
    %70 = vector.broadcast %69 : vector<1x1x128xf32> to vector<4x4x128xf32>
    %71 = arith.mulf %68, %70 : vector<4x4x128xf32>
    %72 = arith.addf %65, %71 : vector<4x4x128xf32>
    %c5_74 = arith.constant 5 : index
    %c0_75 = arith.constant 0 : index
    %c0_76 = arith.constant 0 : index
    %73 = vector.load %arg3[%c5_74, %c0_75, %c0_76] : memref<7x7x128xf32, #tpu.memory_space<vmem>>, vector<1x1x128xf32>
    %74 = vector.shape_cast %73 : vector<1x1x128xf32> to vector<128xf32>
    %c5_77 = arith.constant 5 : index
    %c0_78 = arith.constant 0 : index
    %c0_79 = arith.constant 0 : index
    %75 = vector.load %arg7[%c5_77, %c0_78, %c0_79] : memref<10x4x128xf32, #tpu.memory_space<vmem>>, vector<4x4x128xf32>
    %76 = vector.shape_cast %74 : vector<128xf32> to vector<1x1x128xf32>
    %77 = vector.broadcast %76 : vector<1x1x128xf32> to vector<4x4x128xf32>
    %78 = arith.mulf %75, %77 : vector<4x4x128xf32>
    %79 = arith.addf %72, %78 : vector<4x4x128xf32>
    %c6_80 = arith.constant 6 : index
    %c0_81 = arith.constant 0 : index
    %c0_82 = arith.constant 0 : index
    %80 = vector.load %arg3[%c6_80, %c0_81, %c0_82] : memref<7x7x128xf32, #tpu.memory_space<vmem>>, vector<1x1x128xf32>
    %81 = vector.shape_cast %80 : vector<1x1x128xf32> to vector<128xf32>
    %c6_83 = arith.constant 6 : index
    %c0_84 = arith.constant 0 : index
    %c0_85 = arith.constant 0 : index
    %82 = vector.load %arg7[%c6_83, %c0_84, %c0_85] : memref<10x4x128xf32, #tpu.memory_space<vmem>>, vector<4x4x128xf32>
    %83 = vector.shape_cast %81 : vector<128xf32> to vector<1x1x128xf32>
    %84 = vector.broadcast %83 : vector<1x1x128xf32> to vector<4x4x128xf32>
    %85 = arith.mulf %82, %84 : vector<4x4x128xf32>
    %86 = arith.addf %79, %85 : vector<4x4x128xf32>
    %c0_86 = arith.constant 0 : index
    %c1_87 = arith.constant 1 : index
    %c0_88 = arith.constant 0 : index
    %87 = vector.load %arg6[%c0_86, %c1_87, %c0_88] : memref<10x10x128xf32, #tpu.memory_space<vmem>>, vector<10x4x128xf32>
    %c0_89 = arith.constant 0 : index
    %c0_90 = arith.constant 0 : index
    %c0_91 = arith.constant 0 : index
    %88 = vector.load %arg7[%c0_89, %c0_90, %c0_91] : memref<10x4x128xf32, #tpu.memory_space<vmem>>, vector<10x4x128xf32>
    tpu.vector_store %arg7[%c0_89, %c0_90, %c0_91], %87 {strides = array<i32>} : memref<10x4x128xf32, #tpu.memory_space<vmem>>, vector<10x4x128xf32>,
    %c0_92 = arith.constant 0 : index
    %c1_93 = arith.constant 1 : index
    %c0_94 = arith.constant 0 : index
    %89 = vector.load %arg3[%c0_92, %c1_93, %c0_94] : memref<7x7x128xf32, #tpu.memory_space<vmem>>, vector<1x1x128xf32>
    %90 = vector.shape_cast %89 : vector<1x1x128xf32> to vector<128xf32>
    %c0_95 = arith.constant 0 : index
    %c0_96 = arith.constant 0 : index
    %c0_97 = arith.constant 0 : index
    %91 = vector.load %arg7[%c0_95, %c0_96, %c0_97] : memref<10x4x128xf32, #tpu.memory_space<vmem>>, vector<4x4x128xf32>
    %92 = vector.shape_cast %90 : vector<128xf32> to vector<1x1x128xf32>
    %93 = vector.broadcast %92 : vector<1x1x128xf32> to vector<4x4x128xf32>
    %94 = arith.mulf %91, %93 : vector<4x4x128xf32>
    %95 = arith.addf %86, %94 : vector<4x4x128xf32>
    %c1_98 = arith.constant 1 : index
    %c1_99 = arith.constant 1 : index
    %c0_100 = arith.constant 0 : index
    %96 = vector.load %arg3[%c1_98, %c1_99, %c0_100] : memref<7x7x128xf32, #tpu.memory_space<vmem>>, vector<1x1x128xf32>
    %97 = vector.shape_cast %96 : vector<1x1x128xf32> to vector<128xf32>
    %c1_101 = arith.constant 1 : index
    %c0_102 = arith.constant 0 : index
    %c0_103 = arith.constant 0 : index
    %98 = vector.load %arg7[%c1_101, %c0_102, %c0_103] : memref<10x4x128xf32, #tpu.memory_space<vmem>>, vector<4x4x128xf32>
    %99 = vector.shape_cast %97 : vector<128xf32> to vector<1x1x128xf32>
    %100 = vector.broadcast %99 : vector<1x1x128xf32> to vector<4x4x128xf32>
    %101 = arith.mulf %98, %100 : vector<4x4x128xf32>
    %102 = arith.addf %95, %101 : vector<4x4x128xf32>
    %c2_104 = arith.constant 2 : index
    %c1_105 = arith.constant 1 : index
    %c0_106 = arith.constant 0 : index
    %103 = vector.load %arg3[%c2_104, %c1_105, %c0_106] : memref<7x7x128xf32, #tpu.memory_space<vmem>>, vector<1x1x128xf32>
    %104 = vector.shape_cast %103 : vector<1x1x128xf32> to vector<128xf32>
    %c2_107 = arith.constant 2 : index
    %c0_108 = arith.constant 0 : index
    %c0_109 = arith.constant 0 : index
    %105 = vector.load %arg7[%c2_107, %c0_108, %c0_109] : memref<10x4x128xf32, #tpu.memory_space<vmem>>, vector<4x4x128xf32>
    %106 = vector.shape_cast %104 : vector<128xf32> to vector<1x1x128xf32>
    %107 = vector.broadcast %106 : vector<1x1x128xf32> to vector<4x4x128xf32>
    %108 = arith.mulf %105, %107 : vector<4x4x128xf32>
    %109 = arith.addf %102, %108 : vector<4x4x128xf32>
    %c3_110 = arith.constant 3 : index
    %c1_111 = arith.constant 1 : index
    %c0_112 = arith.constant 0 : index
    %110 = vector.load %arg3[%c3_110, %c1_111, %c0_112] : memref<7x7x128xf32, #tpu.memory_space<vmem>>, vector<1x1x128xf32>
    %111 = vector.shape_cast %110 : vector<1x1x128xf32> to vector<128xf32>
    %c3_113 = arith.constant 3 : index
    %c0_114 = arith.constant 0 : index
    %c0_115 = arith.constant 0 : index
    %112 = vector.load %arg7[%c3_113, %c0_114, %c0_115] : memref<10x4x128xf32, #tpu.memory_space<vmem>>, vector<4x4x128xf32>
    %113 = vector.shape_cast %111 : vector<128xf32> to vector<1x1x128xf32>
    %114 = vector.broadcast %113 : vector<1x1x128xf32> to vector<4x4x128xf32>
    %115 = arith.mulf %112, %114 : vector<4x4x128xf32>
    %116 = arith.addf %109, %115 : vector<4x4x128xf32>
    %c4_116 = arith.constant 4 : index
    %c1_117 = arith.constant 1 : index
    %c0_118 = arith.constant 0 : index
    %117 = vector.load %arg3[%c4_116, %c1_117, %c0_118] : memref<7x7x128xf32, #tpu.memory_space<vmem>>, vector<1x1x128xf32>
    %118 = vector.shape_cast %117 : vector<1x1x128xf32> to vector<128xf32>
    %c4_119 = arith.constant 4 : index
    %c0_120 = arith.constant 0 : index
    %c0_121 = arith.constant 0 : index
    %119 = vector.load %arg7[%c4_119, %c0_120, %c0_121] : memref<10x4x128xf32, #tpu.memory_space<vmem>>, vector<4x4x128xf32>
    %120 = vector.shape_cast %118 : vector<128xf32> to vector<1x1x128xf32>
    %121 = vector.broadcast %120 : vector<1x1x128xf32> to vector<4x4x128xf32>
    %122 = arith.mulf %119, %121 : vector<4x4x128xf32>
    %123 = arith.addf %116, %122 : vector<4x4x128xf32>
    %c5_122 = arith.constant 5 : index
    %c1_123 = arith.constant 1 : index
    %c0_124 = arith.constant 0 : index
    %124 = vector.load %arg3[%c5_122, %c1_123, %c0_124] : memref<7x7x128xf32, #tpu.memory_space<vmem>>, vector<1x1x128xf32>
    %125 = vector.shape_cast %124 : vector<1x1x128xf32> to vector<128xf32>
    %c5_125 = arith.constant 5 : index
    %c0_126 = arith.constant 0 : index
    %c0_127 = arith.constant 0 : index
    %126 = vector.load %arg7[%c5_125, %c0_126, %c0_127] : memref<10x4x128xf32, #tpu.memory_space<vmem>>, vector<4x4x128xf32>
    %127 = vector.shape_cast %125 : vector<128xf32> to vector<1x1x128xf32>
    %128 = vector.broadcast %127 : vector<1x1x128xf32> to vector<4x4x128xf32>
    %129 = arith.mulf %126, %128 : vector<4x4x128xf32>
    %130 = arith.addf %123, %129 : vector<4x4x128xf32>
    %c6_128 = arith.constant 6 : index
    %c1_129 = arith.constant 1 : index
    %c0_130 = arith.constant 0 : index
    %131 = vector.load %arg3[%c6_128, %c1_129, %c0_130] : memref<7x7x128xf32, #tpu.memory_space<vmem>>, vector<1x1x128xf32>
    %132 = vector.shape_cast %131 : vector<1x1x128xf32> to vector<128xf32>
    %c6_131 = arith.constant 6 : index
    %c0_132 = arith.constant 0 : index
    %c0_133 = arith.constant 0 : index
    %133 = vector.load %arg7[%c6_131, %c0_132, %c0_133] : memref<10x4x128xf32, #tpu.memory_space<vmem>>, vector<4x4x128xf32>
    %134 = vector.shape_cast %132 : vector<128xf32> to vector<1x1x128xf32>
    %135 = vector.broadcast %134 : vector<1x1x128xf32> to vector<4x4x128xf32>
    %136 = arith.mulf %133, %135 : vector<4x4x128xf32>
    %137 = arith.addf %130, %136 : vector<4x4x128xf32>
    %c0_134 = arith.constant 0 : index
    %c2_135 = arith.constant 2 : index
    %c0_136 = arith.constant 0 : index
    %138 = vector.load %arg6[%c0_134, %c2_135, %c0_136] : memref<10x10x128xf32, #tpu.memory_space<vmem>>, vector<10x4x128xf32>
    %c0_137 = arith.constant 0 : index
    %c0_138 = arith.constant 0 : index
    %c0_139 = arith.constant 0 : index
    %139 = vector.load %arg7[%c0_137, %c0_138, %c0_139] : memref<10x4x128xf32, #tpu.memory_space<vmem>>, vector<10x4x128xf32>
    tpu.vector_store %arg7[%c0_137, %c0_138, %c0_139], %138 {strides = array<i32>} : memref<10x4x128xf32, #tpu.memory_space<vmem>>, vector<10x4x128xf32>,
    %c0_140 = arith.constant 0 : index
    %c2_141 = arith.constant 2 : index
    %c0_142 = arith.constant 0 : index
    %140 = vector.load %arg3[%c0_140, %c2_141, %c0_142] : memref<7x7x128xf32, #tpu.memory_space<vmem>>, vector<1x1x128xf32>
    %141 = vector.shape_cast %140 : vector<1x1x128xf32> to vector<128xf32>
    %c0_143 = arith.constant 0 : index
    %c0_144 = arith.constant 0 : index
    %c0_145 = arith.constant 0 : index
    %142 = vector.load %arg7[%c0_143, %c0_144, %c0_145] : memref<10x4x128xf32, #tpu.memory_space<vmem>>, vector<4x4x128xf32>
    %143 = vector.shape_cast %141 : vector<128xf32> to vector<1x1x128xf32>
    %144 = vector.broadcast %143 : vector<1x1x128xf32> to vector<4x4x128xf32>
    %145 = arith.mulf %142, %144 : vector<4x4x128xf32>
    %146 = arith.addf %137, %145 : vector<4x4x128xf32>
    %c1_146 = arith.constant 1 : index
    %c2_147 = arith.constant 2 : index
    %c0_148 = arith.constant 0 : index
    %147 = vector.load %arg3[%c1_146, %c2_147, %c0_148] : memref<7x7x128xf32, #tpu.memory_space<vmem>>, vector<1x1x128xf32>
    %148 = vector.shape_cast %147 : vector<1x1x128xf32> to vector<128xf32>
    %c1_149 = arith.constant 1 : index
    %c0_150 = arith.constant 0 : index
    %c0_151 = arith.constant 0 : index
    %149 = vector.load %arg7[%c1_149, %c0_150, %c0_151] : memref<10x4x128xf32, #tpu.memory_space<vmem>>, vector<4x4x128xf32>
    %150 = vector.shape_cast %148 : vector<128xf32> to vector<1x1x128xf32>
    %151 = vector.broadcast %150 : vector<1x1x128xf32> to vector<4x4x128xf32>
    %152 = arith.mulf %149, %151 : vector<4x4x128xf32>
    %153 = arith.addf %146, %152 : vector<4x4x128xf32>
    %c2_152 = arith.constant 2 : index
    %c2_153 = arith.constant 2 : index
    %c0_154 = arith.constant 0 : index
    %154 = vector.load %arg3[%c2_152, %c2_153, %c0_154] : memref<7x7x128xf32, #tpu.memory_space<vmem>>, vector<1x1x128xf32>
    %155 = vector.shape_cast %154 : vector<1x1x128xf32> to vector<128xf32>
    %c2_155 = arith.constant 2 : index
    %c0_156 = arith.constant 0 : index
    %c0_157 = arith.constant 0 : index
    %156 = vector.load %arg7[%c2_155, %c0_156, %c0_157] : memref<10x4x128xf32, #tpu.memory_space<vmem>>, vector<4x4x128xf32>
    %157 = vector.shape_cast %155 : vector<128xf32> to vector<1x1x128xf32>
    %158 = vector.broadcast %157 : vector<1x1x128xf32> to vector<4x4x128xf32>
    %159 = arith.mulf %156, %158 : vector<4x4x128xf32>
    %160 = arith.addf %153, %159 : vector<4x4x128xf32>
    %c3_158 = arith.constant 3 : index
    %c2_159 = arith.constant 2 : index
    %c0_160 = arith.constant 0 : index
    %161 = vector.load %arg3[%c3_158, %c2_159, %c0_160] : memref<7x7x128xf32, #tpu.memory_space<vmem>>, vector<1x1x128xf32>
    %162 = vector.shape_cast %161 : vector<1x1x128xf32> to vector<128xf32>
    %c3_161 = arith.constant 3 : index
    %c0_162 = arith.constant 0 : index
    %c0_163 = arith.constant 0 : index
    %163 = vector.load %arg7[%c3_161, %c0_162, %c0_163] : memref<10x4x128xf32, #tpu.memory_space<vmem>>, vector<4x4x128xf32>
    %164 = vector.shape_cast %162 : vector<128xf32> to vector<1x1x128xf32>
    %165 = vector.broadcast %164 : vector<1x1x128xf32> to vector<4x4x128xf32>
    %166 = arith.mulf %163, %165 : vector<4x4x128xf32>
    %167 = arith.addf %160, %166 : vector<4x4x128xf32>
    %c4_164 = arith.constant 4 : index
    %c2_165 = arith.constant 2 : index
    %c0_166 = arith.constant 0 : index
    %168 = vector.load %arg3[%c4_164, %c2_165, %c0_166] : memref<7x7x128xf32, #tpu.memory_space<vmem>>, vector<1x1x128xf32>
    %169 = vector.shape_cast %168 : vector<1x1x128xf32> to vector<128xf32>
    %c4_167 = arith.constant 4 : index
    %c0_168 = arith.constant 0 : index
    %c0_169 = arith.constant 0 : index
    %170 = vector.load %arg7[%c4_167, %c0_168, %c0_169] : memref<10x4x128xf32, #tpu.memory_space<vmem>>, vector<4x4x128xf32>
    %171 = vector.shape_cast %169 : vector<128xf32> to vector<1x1x128xf32>
    %172 = vector.broadcast %171 : vector<1x1x128xf32> to vector<4x4x128xf32>
    %173 = arith.mulf %170, %172 : vector<4x4x128xf32>
    %174 = arith.addf %167, %173 : vector<4x4x128xf32>
    %c5_170 = arith.constant 5 : index
    %c2_171 = arith.constant 2 : index
    %c0_172 = arith.constant 0 : index
    %175 = vector.load %arg3[%c5_170, %c2_171, %c0_172] : memref<7x7x128xf32, #tpu.memory_space<vmem>>, vector<1x1x128xf32>
    %176 = vector.shape_cast %175 : vector<1x1x128xf32> to vector<128xf32>
    %c5_173 = arith.constant 5 : index
    %c0_174 = arith.constant 0 : index
    %c0_175 = arith.constant 0 : index
    %177 = vector.load %arg7[%c5_173, %c0_174, %c0_175] : memref<10x4x128xf32, #tpu.memory_space<vmem>>, vector<4x4x128xf32>
    %178 = vector.shape_cast %176 : vector<128xf32> to vector<1x1x128xf32>
    %179 = vector.broadcast %178 : vector<1x1x128xf32> to vector<4x4x128xf32>
    %180 = arith.mulf %177, %179 : vector<4x4x128xf32>
    %181 = arith.addf %174, %180 : vector<4x4x128xf32>
    %c6_176 = arith.constant 6 : index
    %c2_177 = arith.constant 2 : index
    %c0_178 = arith.constant 0 : index
    %182 = vector.load %arg3[%c6_176, %c2_177, %c0_178] : memref<7x7x128xf32, #tpu.memory_space<vmem>>, vector<1x1x128xf32>
    %183 = vector.shape_cast %182 : vector<1x1x128xf32> to vector<128xf32>
    %c6_179 = arith.constant 6 : index
    %c0_180 = arith.constant 0 : index
    %c0_181 = arith.constant 0 : index
    %184 = vector.load %arg7[%c6_179, %c0_180, %c0_181] : memref<10x4x128xf32, #tpu.memory_space<vmem>>, vector<4x4x128xf32>
    %185 = vector.shape_cast %183 : vector<128xf32> to vector<1x1x128xf32>
    %186 = vector.broadcast %185 : vector<1x1x128xf32> to vector<4x4x128xf32>
    %187 = arith.mulf %184, %186 : vector<4x4x128xf32>
    %188 = arith.addf %181, %187 : vector<4x4x128xf32>
    %c0_182 = arith.constant 0 : index
    %c3_183 = arith.constant 3 : index
    %c0_184 = arith.constant 0 : index
    %189 = vector.load %arg6[%c0_182, %c3_183, %c0_184] : memref<10x10x128xf32, #tpu.memory_space<vmem>>, vector<10x4x128xf32>
    %c0_185 = arith.constant 0 : index
    %c0_186 = arith.constant 0 : index
    %c0_187 = arith.constant 0 : index
    %190 = vector.load %arg7[%c0_185, %c0_186, %c0_187] : memref<10x4x128xf32, #tpu.memory_space<vmem>>, vector<10x4x128xf32>
    tpu.vector_store %arg7[%c0_185, %c0_186, %c0_187], %189 {strides = array<i32>} : memref<10x4x128xf32, #tpu.memory_space<vmem>>, vector<10x4x128xf32>,
    %c0_188 = arith.constant 0 : index
    %c3_189 = arith.constant 3 : index
    %c0_190 = arith.constant 0 : index
    %191 = vector.load %arg3[%c0_188, %c3_189, %c0_190] : memref<7x7x128xf32, #tpu.memory_space<vmem>>, vector<1x1x128xf32>
    %192 = vector.shape_cast %191 : vector<1x1x128xf32> to vector<128xf32>
    %c0_191 = arith.constant 0 : index
    %c0_192 = arith.constant 0 : index
    %c0_193 = arith.constant 0 : index
    %193 = vector.load %arg7[%c0_191, %c0_192, %c0_193] : memref<10x4x128xf32, #tpu.memory_space<vmem>>, vector<4x4x128xf32>
    %194 = vector.shape_cast %192 : vector<128xf32> to vector<1x1x128xf32>
    %195 = vector.broadcast %194 : vector<1x1x128xf32> to vector<4x4x128xf32>
    %196 = arith.mulf %193, %195 : vector<4x4x128xf32>
    %197 = arith.addf %188, %196 : vector<4x4x128xf32>
    %c1_194 = arith.constant 1 : index
    %c3_195 = arith.constant 3 : index
    %c0_196 = arith.constant 0 : index
    %198 = vector.load %arg3[%c1_194, %c3_195, %c0_196] : memref<7x7x128xf32, #tpu.memory_space<vmem>>, vector<1x1x128xf32>
    %199 = vector.shape_cast %198 : vector<1x1x128xf32> to vector<128xf32>
    %c1_197 = arith.constant 1 : index
    %c0_198 = arith.constant 0 : index
    %c0_199 = arith.constant 0 : index
    %200 = vector.load %arg7[%c1_197, %c0_198, %c0_199] : memref<10x4x128xf32, #tpu.memory_space<vmem>>, vector<4x4x128xf32>
    %201 = vector.shape_cast %199 : vector<128xf32> to vector<1x1x128xf32>
    %202 = vector.broadcast %201 : vector<1x1x128xf32> to vector<4x4x128xf32>
    %203 = arith.mulf %200, %202 : vector<4x4x128xf32>
    %204 = arith.addf %197, %203 : vector<4x4x128xf32>
    %c2_200 = arith.constant 2 : index
    %c3_201 = arith.constant 3 : index
    %c0_202 = arith.constant 0 : index
    %205 = vector.load %arg3[%c2_200, %c3_201, %c0_202] : memref<7x7x128xf32, #tpu.memory_space<vmem>>, vector<1x1x128xf32>
    %206 = vector.shape_cast %205 : vector<1x1x128xf32> to vector<128xf32>
    %c2_203 = arith.constant 2 : index
    %c0_204 = arith.constant 0 : index
    %c0_205 = arith.constant 0 : index
    %207 = vector.load %arg7[%c2_203, %c0_204, %c0_205] : memref<10x4x128xf32, #tpu.memory_space<vmem>>, vector<4x4x128xf32>
    %208 = vector.shape_cast %206 : vector<128xf32> to vector<1x1x128xf32>
    %209 = vector.broadcast %208 : vector<1x1x128xf32> to vector<4x4x128xf32>
    %210 = arith.mulf %207, %209 : vector<4x4x128xf32>
    %211 = arith.addf %204, %210 : vector<4x4x128xf32>
    %c3_206 = arith.constant 3 : index
    %c3_207 = arith.constant 3 : index
    %c0_208 = arith.constant 0 : index
    %212 = vector.load %arg3[%c3_206, %c3_207, %c0_208] : memref<7x7x128xf32, #tpu.memory_space<vmem>>, vector<1x1x128xf32>
    %213 = vector.shape_cast %212 : vector<1x1x128xf32> to vector<128xf32>
    %c3_209 = arith.constant 3 : index
    %c0_210 = arith.constant 0 : index
    %c0_211 = arith.constant 0 : index
    %214 = vector.load %arg7[%c3_209, %c0_210, %c0_211] : memref<10x4x128xf32, #tpu.memory_space<vmem>>, vector<4x4x128xf32>
    %215 = vector.shape_cast %213 : vector<128xf32> to vector<1x1x128xf32>
    %216 = vector.broadcast %215 : vector<1x1x128xf32> to vector<4x4x128xf32>
    %217 = arith.mulf %214, %216 : vector<4x4x128xf32>
    %218 = arith.addf %211, %217 : vector<4x4x128xf32>
    %c4_212 = arith.constant 4 : index
    %c3_213 = arith.constant 3 : index
    %c0_214 = arith.constant 0 : index
    %219 = vector.load %arg3[%c4_212, %c3_213, %c0_214] : memref<7x7x128xf32, #tpu.memory_space<vmem>>, vector<1x1x128xf32>
    %220 = vector.shape_cast %219 : vector<1x1x128xf32> to vector<128xf32>
    %c4_215 = arith.constant 4 : index
    %c0_216 = arith.constant 0 : index
    %c0_217 = arith.constant 0 : index
    %221 = vector.load %arg7[%c4_215, %c0_216, %c0_217] : memref<10x4x128xf32, #tpu.memory_space<vmem>>, vector<4x4x128xf32>
    %222 = vector.shape_cast %220 : vector<128xf32> to vector<1x1x128xf32>
    %223 = vector.broadcast %222 : vector<1x1x128xf32> to vector<4x4x128xf32>
    %224 = arith.mulf %221, %223 : vector<4x4x128xf32>
    %225 = arith.addf %218, %224 : vector<4x4x128xf32>
    %c5_218 = arith.constant 5 : index
    %c3_219 = arith.constant 3 : index
    %c0_220 = arith.constant 0 : index
    %226 = vector.load %arg3[%c5_218, %c3_219, %c0_220] : memref<7x7x128xf32, #tpu.memory_space<vmem>>, vector<1x1x128xf32>
    %227 = vector.shape_cast %226 : vector<1x1x128xf32> to vector<128xf32>
    %c5_221 = arith.constant 5 : index
    %c0_222 = arith.constant 0 : index
    %c0_223 = arith.constant 0 : index
    %228 = vector.load %arg7[%c5_221, %c0_222, %c0_223] : memref<10x4x128xf32, #tpu.memory_space<vmem>>, vector<4x4x128xf32>
    %229 = vector.shape_cast %227 : vector<128xf32> to vector<1x1x128xf32>
    %230 = vector.broadcast %229 : vector<1x1x128xf32> to vector<4x4x128xf32>
    %231 = arith.mulf %228, %230 : vector<4x4x128xf32>
    %232 = arith.addf %225, %231 : vector<4x4x128xf32>
    %c6_224 = arith.constant 6 : index
    %c3_225 = arith.constant 3 : index
    %c0_226 = arith.constant 0 : index
    %233 = vector.load %arg3[%c6_224, %c3_225, %c0_226] : memref<7x7x128xf32, #tpu.memory_space<vmem>>, vector<1x1x128xf32>
    %234 = vector.shape_cast %233 : vector<1x1x128xf32> to vector<128xf32>
    %c6_227 = arith.constant 6 : index
    %c0_228 = arith.constant 0 : index
    %c0_229 = arith.constant 0 : index
    %235 = vector.load %arg7[%c6_227, %c0_228, %c0_229] : memref<10x4x128xf32, #tpu.memory_space<vmem>>, vector<4x4x128xf32>
    %236 = vector.shape_cast %234 : vector<128xf32> to vector<1x1x128xf32>
    %237 = vector.broadcast %236 : vector<1x1x128xf32> to vector<4x4x128xf32>
    %238 = arith.mulf %235, %237 : vector<4x4x128xf32>
    %239 = arith.addf %232, %238 : vector<4x4x128xf32>
    %c0_230 = arith.constant 0 : index
    %c4_231 = arith.constant 4 : index
    %c0_232 = arith.constant 0 : index
    %240 = vector.load %arg6[%c0_230, %c4_231, %c0_232] : memref<10x10x128xf32, #tpu.memory_space<vmem>>, vector<10x4x128xf32>
    %c0_233 = arith.constant 0 : index
    %c0_234 = arith.constant 0 : index
    %c0_235 = arith.constant 0 : index
    %241 = vector.load %arg7[%c0_233, %c0_234, %c0_235] : memref<10x4x128xf32, #tpu.memory_space<vmem>>, vector<10x4x128xf32>
    tpu.vector_store %arg7[%c0_233, %c0_234, %c0_235], %240 {strides = array<i32>} : memref<10x4x128xf32, #tpu.memory_space<vmem>>, vector<10x4x128xf32>,
    %c0_236 = arith.constant 0 : index
    %c4_237 = arith.constant 4 : index
    %c0_238 = arith.constant 0 : index
    %242 = vector.load %arg3[%c0_236, %c4_237, %c0_238] : memref<7x7x128xf32, #tpu.memory_space<vmem>>, vector<1x1x128xf32>
    %243 = vector.shape_cast %242 : vector<1x1x128xf32> to vector<128xf32>
    %c0_239 = arith.constant 0 : index
    %c0_240 = arith.constant 0 : index
    %c0_241 = arith.constant 0 : index
    %244 = vector.load %arg7[%c0_239, %c0_240, %c0_241] : memref<10x4x128xf32, #tpu.memory_space<vmem>>, vector<4x4x128xf32>
    %245 = vector.shape_cast %243 : vector<128xf32> to vector<1x1x128xf32>
    %246 = vector.broadcast %245 : vector<1x1x128xf32> to vector<4x4x128xf32>
    %247 = arith.mulf %244, %246 : vector<4x4x128xf32>
    %248 = arith.addf %239, %247 : vector<4x4x128xf32>
    %c1_242 = arith.constant 1 : index
    %c4_243 = arith.constant 4 : index
    %c0_244 = arith.constant 0 : index
    %249 = vector.load %arg3[%c1_242, %c4_243, %c0_244] : memref<7x7x128xf32, #tpu.memory_space<vmem>>, vector<1x1x128xf32>
    %250 = vector.shape_cast %249 : vector<1x1x128xf32> to vector<128xf32>
    %c1_245 = arith.constant 1 : index
    %c0_246 = arith.constant 0 : index
    %c0_247 = arith.constant 0 : index
    %251 = vector.load %arg7[%c1_245, %c0_246, %c0_247] : memref<10x4x128xf32, #tpu.memory_space<vmem>>, vector<4x4x128xf32>
    %252 = vector.shape_cast %250 : vector<128xf32> to vector<1x1x128xf32>
    %253 = vector.broadcast %252 : vector<1x1x128xf32> to vector<4x4x128xf32>
    %254 = arith.mulf %251, %253 : vector<4x4x128xf32>
    %255 = arith.addf %248, %254 : vector<4x4x128xf32>
    %c2_248 = arith.constant 2 : index
    %c4_249 = arith.constant 4 : index
    %c0_250 = arith.constant 0 : index
    %256 = vector.load %arg3[%c2_248, %c4_249, %c0_250] : memref<7x7x128xf32, #tpu.memory_space<vmem>>, vector<1x1x128xf32>
    %257 = vector.shape_cast %256 : vector<1x1x128xf32> to vector<128xf32>
    %c2_251 = arith.constant 2 : index
    %c0_252 = arith.constant 0 : index
    %c0_253 = arith.constant 0 : index
    %258 = vector.load %arg7[%c2_251, %c0_252, %c0_253] : memref<10x4x128xf32, #tpu.memory_space<vmem>>, vector<4x4x128xf32>
    %259 = vector.shape_cast %257 : vector<128xf32> to vector<1x1x128xf32>
    %260 = vector.broadcast %259 : vector<1x1x128xf32> to vector<4x4x128xf32>
    %261 = arith.mulf %258, %260 : vector<4x4x128xf32>
    %262 = arith.addf %255, %261 : vector<4x4x128xf32>
    %c3_254 = arith.constant 3 : index
    %c4_255 = arith.constant 4 : index
    %c0_256 = arith.constant 0 : index
    %263 = vector.load %arg3[%c3_254, %c4_255, %c0_256] : memref<7x7x128xf32, #tpu.memory_space<vmem>>, vector<1x1x128xf32>
    %264 = vector.shape_cast %263 : vector<1x1x128xf32> to vector<128xf32>
    %c3_257 = arith.constant 3 : index
    %c0_258 = arith.constant 0 : index
    %c0_259 = arith.constant 0 : index
    %265 = vector.load %arg7[%c3_257, %c0_258, %c0_259] : memref<10x4x128xf32, #tpu.memory_space<vmem>>, vector<4x4x128xf32>
    %266 = vector.shape_cast %264 : vector<128xf32> to vector<1x1x128xf32>
    %267 = vector.broadcast %266 : vector<1x1x128xf32> to vector<4x4x128xf32>
    %268 = arith.mulf %265, %267 : vector<4x4x128xf32>
    %269 = arith.addf %262, %268 : vector<4x4x128xf32>
    %c4_260 = arith.constant 4 : index
    %c4_261 = arith.constant 4 : index
    %c0_262 = arith.constant 0 : index
    %270 = vector.load %arg3[%c4_260, %c4_261, %c0_262] : memref<7x7x128xf32, #tpu.memory_space<vmem>>, vector<1x1x128xf32>
    %271 = vector.shape_cast %270 : vector<1x1x128xf32> to vector<128xf32>
    %c4_263 = arith.constant 4 : index
    %c0_264 = arith.constant 0 : index
    %c0_265 = arith.constant 0 : index
    %272 = vector.load %arg7[%c4_263, %c0_264, %c0_265] : memref<10x4x128xf32, #tpu.memory_space<vmem>>, vector<4x4x128xf32>
    %273 = vector.shape_cast %271 : vector<128xf32> to vector<1x1x128xf32>
    %274 = vector.broadcast %273 : vector<1x1x128xf32> to vector<4x4x128xf32>
    %275 = arith.mulf %272, %274 : vector<4x4x128xf32>
    %276 = arith.addf %269, %275 : vector<4x4x128xf32>
    %c5_266 = arith.constant 5 : index
    %c4_267 = arith.constant 4 : index
    %c0_268 = arith.constant 0 : index
    %277 = vector.load %arg3[%c5_266, %c4_267, %c0_268] : memref<7x7x128xf32, #tpu.memory_space<vmem>>, vector<1x1x128xf32>
    %278 = vector.shape_cast %277 : vector<1x1x128xf32> to vector<128xf32>
    %c5_269 = arith.constant 5 : index
    %c0_270 = arith.constant 0 : index
    %c0_271 = arith.constant 0 : index
    %279 = vector.load %arg7[%c5_269, %c0_270, %c0_271] : memref<10x4x128xf32, #tpu.memory_space<vmem>>, vector<4x4x128xf32>
    %280 = vector.shape_cast %278 : vector<128xf32> to vector<1x1x128xf32>
    %281 = vector.broadcast %280 : vector<1x1x128xf32> to vector<4x4x128xf32>
    %282 = arith.mulf %279, %281 : vector<4x4x128xf32>
    %283 = arith.addf %276, %282 : vector<4x4x128xf32>
    %c6_272 = arith.constant 6 : index
    %c4_273 = arith.constant 4 : index
    %c0_274 = arith.constant 0 : index
    %284 = vector.load %arg3[%c6_272, %c4_273, %c0_274] : memref<7x7x128xf32, #tpu.memory_space<vmem>>, vector<1x1x128xf32>
    %285 = vector.shape_cast %284 : vector<1x1x128xf32> to vector<128xf32>
    %c6_275 = arith.constant 6 : index
    %c0_276 = arith.constant 0 : index
    %c0_277 = arith.constant 0 : index
    %286 = vector.load %arg7[%c6_275, %c0_276, %c0_277] : memref<10x4x128xf32, #tpu.memory_space<vmem>>, vector<4x4x128xf32>
    %287 = vector.shape_cast %285 : vector<128xf32> to vector<1x1x128xf32>
    %288 = vector.broadcast %287 : vector<1x1x128xf32> to vector<4x4x128xf32>
    %289 = arith.mulf %286, %288 : vector<4x4x128xf32>
    %290 = arith.addf %283, %289 : vector<4x4x128xf32>
    %c0_278 = arith.constant 0 : index
    %c5_279 = arith.constant 5 : index
    %c0_280 = arith.constant 0 : index
    %291 = vector.load %arg6[%c0_278, %c5_279, %c0_280] : memref<10x10x128xf32, #tpu.memory_space<vmem>>, vector<10x4x128xf32>
    %c0_281 = arith.constant 0 : index
    %c0_282 = arith.constant 0 : index
    %c0_283 = arith.constant 0 : index
    %292 = vector.load %arg7[%c0_281, %c0_282, %c0_283] : memref<10x4x128xf32, #tpu.memory_space<vmem>>, vector<10x4x128xf32>
    tpu.vector_store %arg7[%c0_281, %c0_282, %c0_283], %291 {strides = array<i32>} : memref<10x4x128xf32, #tpu.memory_space<vmem>>, vector<10x4x128xf32>,
    %c0_284 = arith.constant 0 : index
    %c5_285 = arith.constant 5 : index
    %c0_286 = arith.constant 0 : index
    %293 = vector.load %arg3[%c0_284, %c5_285, %c0_286] : memref<7x7x128xf32, #tpu.memory_space<vmem>>, vector<1x1x128xf32>
    %294 = vector.shape_cast %293 : vector<1x1x128xf32> to vector<128xf32>
    %c0_287 = arith.constant 0 : index
    %c0_288 = arith.constant 0 : index
    %c0_289 = arith.constant 0 : index
    %295 = vector.load %arg7[%c0_287, %c0_288, %c0_289] : memref<10x4x128xf32, #tpu.memory_space<vmem>>, vector<4x4x128xf32>
    %296 = vector.shape_cast %294 : vector<128xf32> to vector<1x1x128xf32>
    %297 = vector.broadcast %296 : vector<1x1x128xf32> to vector<4x4x128xf32>
    %298 = arith.mulf %295, %297 : vector<4x4x128xf32>
    %299 = arith.addf %290, %298 : vector<4x4x128xf32>
    %c1_290 = arith.constant 1 : index
    %c5_291 = arith.constant 5 : index
    %c0_292 = arith.constant 0 : index
    %300 = vector.load %arg3[%c1_290, %c5_291, %c0_292] : memref<7x7x128xf32, #tpu.memory_space<vmem>>, vector<1x1x128xf32>
    %301 = vector.shape_cast %300 : vector<1x1x128xf32> to vector<128xf32>
    %c1_293 = arith.constant 1 : index
    %c0_294 = arith.constant 0 : index
    %c0_295 = arith.constant 0 : index
    %302 = vector.load %arg7[%c1_293, %c0_294, %c0_295] : memref<10x4x128xf32, #tpu.memory_space<vmem>>, vector<4x4x128xf32>
    %303 = vector.shape_cast %301 : vector<128xf32> to vector<1x1x128xf32>
    %304 = vector.broadcast %303 : vector<1x1x128xf32> to vector<4x4x128xf32>
    %305 = arith.mulf %302, %304 : vector<4x4x128xf32>
    %306 = arith.addf %299, %305 : vector<4x4x128xf32>
    %c2_296 = arith.constant 2 : index
    %c5_297 = arith.constant 5 : index
    %c0_298 = arith.constant 0 : index
    %307 = vector.load %arg3[%c2_296, %c5_297, %c0_298] : memref<7x7x128xf32, #tpu.memory_space<vmem>>, vector<1x1x128xf32>
    %308 = vector.shape_cast %307 : vector<1x1x128xf32> to vector<128xf32>
    %c2_299 = arith.constant 2 : index
    %c0_300 = arith.constant 0 : index
    %c0_301 = arith.constant 0 : index
    %309 = vector.load %arg7[%c2_299, %c0_300, %c0_301] : memref<10x4x128xf32, #tpu.memory_space<vmem>>, vector<4x4x128xf32>
    %310 = vector.shape_cast %308 : vector<128xf32> to vector<1x1x128xf32>
    %311 = vector.broadcast %310 : vector<1x1x128xf32> to vector<4x4x128xf32>
    %312 = arith.mulf %309, %311 : vector<4x4x128xf32>
    %313 = arith.addf %306, %312 : vector<4x4x128xf32>
    %c3_302 = arith.constant 3 : index
    %c5_303 = arith.constant 5 : index
    %c0_304 = arith.constant 0 : index
    %314 = vector.load %arg3[%c3_302, %c5_303, %c0_304] : memref<7x7x128xf32, #tpu.memory_space<vmem>>, vector<1x1x128xf32>
    %315 = vector.shape_cast %314 : vector<1x1x128xf32> to vector<128xf32>
    %c3_305 = arith.constant 3 : index
    %c0_306 = arith.constant 0 : index
    %c0_307 = arith.constant 0 : index
    %316 = vector.load %arg7[%c3_305, %c0_306, %c0_307] : memref<10x4x128xf32, #tpu.memory_space<vmem>>, vector<4x4x128xf32>
    %317 = vector.shape_cast %315 : vector<128xf32> to vector<1x1x128xf32>
    %318 = vector.broadcast %317 : vector<1x1x128xf32> to vector<4x4x128xf32>
    %319 = arith.mulf %316, %318 : vector<4x4x128xf32>
    %320 = arith.addf %313, %319 : vector<4x4x128xf32>
    %c4_308 = arith.constant 4 : index
    %c5_309 = arith.constant 5 : index
    %c0_310 = arith.constant 0 : index
    %321 = vector.load %arg3[%c4_308, %c5_309, %c0_310] : memref<7x7x128xf32, #tpu.memory_space<vmem>>, vector<1x1x128xf32>
    %322 = vector.shape_cast %321 : vector<1x1x128xf32> to vector<128xf32>
    %c4_311 = arith.constant 4 : index
    %c0_312 = arith.constant 0 : index
    %c0_313 = arith.constant 0 : index
    %323 = vector.load %arg7[%c4_311, %c0_312, %c0_313] : memref<10x4x128xf32, #tpu.memory_space<vmem>>, vector<4x4x128xf32>
    %324 = vector.shape_cast %322 : vector<128xf32> to vector<1x1x128xf32>
    %325 = vector.broadcast %324 : vector<1x1x128xf32> to vector<4x4x128xf32>
    %326 = arith.mulf %323, %325 : vector<4x4x128xf32>
    %327 = arith.addf %320, %326 : vector<4x4x128xf32>
    %c5_314 = arith.constant 5 : index
    %c5_315 = arith.constant 5 : index
    %c0_316 = arith.constant 0 : index
    %328 = vector.load %arg3[%c5_314, %c5_315, %c0_316] : memref<7x7x128xf32, #tpu.memory_space<vmem>>, vector<1x1x128xf32>
    %329 = vector.shape_cast %328 : vector<1x1x128xf32> to vector<128xf32>
    %c5_317 = arith.constant 5 : index
    %c0_318 = arith.constant 0 : index
    %c0_319 = arith.constant 0 : index
    %330 = vector.load %arg7[%c5_317, %c0_318, %c0_319] : memref<10x4x128xf32, #tpu.memory_space<vmem>>, vector<4x4x128xf32>
    %331 = vector.shape_cast %329 : vector<128xf32> to vector<1x1x128xf32>
    %332 = vector.broadcast %331 : vector<1x1x128xf32> to vector<4x4x128xf32>
    %333 = arith.mulf %330, %332 : vector<4x4x128xf32>
    %334 = arith.addf %327, %333 : vector<4x4x128xf32>
    %c6_320 = arith.constant 6 : index
    %c5_321 = arith.constant 5 : index
    %c0_322 = arith.constant 0 : index
    %335 = vector.load %arg3[%c6_320, %c5_321, %c0_322] : memref<7x7x128xf32, #tpu.memory_space<vmem>>, vector<1x1x128xf32>
    %336 = vector.shape_cast %335 : vector<1x1x128xf32> to vector<128xf32>
    %c6_323 = arith.constant 6 : index
    %c0_324 = arith.constant 0 : index
    %c0_325 = arith.constant 0 : index
    %337 = vector.load %arg7[%c6_323, %c0_324, %c0_325] : memref<10x4x128xf32, #tpu.memory_space<vmem>>, vector<4x4x128xf32>
    %338 = vector.shape_cast %336 : vector<128xf32> to vector<1x1x128xf32>
    %339 = vector.broadcast %338 : vector<1x1x128xf32> to vector<4x4x128xf32>
    %340 = arith.mulf %337, %339 : vector<4x4x128xf32>
    %341 = arith.addf %334, %340 : vector<4x4x128xf32>
    %c0_326 = arith.constant 0 : index
    %c6_327 = arith.constant 6 : index
    %c0_328 = arith.constant 0 : index
    %342 = vector.load %arg6[%c0_326, %c6_327, %c0_328] : memref<10x10x128xf32, #tpu.memory_space<vmem>>, vector<10x4x128xf32>
    %c0_329 = arith.constant 0 : index
    %c0_330 = arith.constant 0 : index
    %c0_331 = arith.constant 0 : index
    %343 = vector.load %arg7[%c0_329, %c0_330, %c0_331] : memref<10x4x128xf32, #tpu.memory_space<vmem>>, vector<10x4x128xf32>
    tpu.vector_store %arg7[%c0_329, %c0_330, %c0_331], %342 {strides = array<i32>} : memref<10x4x128xf32, #tpu.memory_space<vmem>>, vector<10x4x128xf32>,
    %c0_332 = arith.constant 0 : index
    %c6_333 = arith.constant 6 : index
    %c0_334 = arith.constant 0 : index
    %344 = vector.load %arg3[%c0_332, %c6_333, %c0_334] : memref<7x7x128xf32, #tpu.memory_space<vmem>>, vector<1x1x128xf32>
    %345 = vector.shape_cast %344 : vector<1x1x128xf32> to vector<128xf32>
    %c0_335 = arith.constant 0 : index
    %c0_336 = arith.constant 0 : index
    %c0_337 = arith.constant 0 : index
    %346 = vector.load %arg7[%c0_335, %c0_336, %c0_337] : memref<10x4x128xf32, #tpu.memory_space<vmem>>, vector<4x4x128xf32>
    %347 = vector.shape_cast %345 : vector<128xf32> to vector<1x1x128xf32>
    %348 = vector.broadcast %347 : vector<1x1x128xf32> to vector<4x4x128xf32>
    %349 = arith.mulf %346, %348 : vector<4x4x128xf32>
    %350 = arith.addf %341, %349 : vector<4x4x128xf32>
    %c1_338 = arith.constant 1 : index
    %c6_339 = arith.constant 6 : index
    %c0_340 = arith.constant 0 : index
    %351 = vector.load %arg3[%c1_338, %c6_339, %c0_340] : memref<7x7x128xf32, #tpu.memory_space<vmem>>, vector<1x1x128xf32>
    %352 = vector.shape_cast %351 : vector<1x1x128xf32> to vector<128xf32>
    %c1_341 = arith.constant 1 : index
    %c0_342 = arith.constant 0 : index
    %c0_343 = arith.constant 0 : index
    %353 = vector.load %arg7[%c1_341, %c0_342, %c0_343] : memref<10x4x128xf32, #tpu.memory_space<vmem>>, vector<4x4x128xf32>
    %354 = vector.shape_cast %352 : vector<128xf32> to vector<1x1x128xf32>
    %355 = vector.broadcast %354 : vector<1x1x128xf32> to vector<4x4x128xf32>
    %356 = arith.mulf %353, %355 : vector<4x4x128xf32>
    %357 = arith.addf %350, %356 : vector<4x4x128xf32>
    %c2_344 = arith.constant 2 : index
    %c6_345 = arith.constant 6 : index
    %c0_346 = arith.constant 0 : index
    %358 = vector.load %arg3[%c2_344, %c6_345, %c0_346] : memref<7x7x128xf32, #tpu.memory_space<vmem>>, vector<1x1x128xf32>
    %359 = vector.shape_cast %358 : vector<1x1x128xf32> to vector<128xf32>
    %c2_347 = arith.constant 2 : index
    %c0_348 = arith.constant 0 : index
    %c0_349 = arith.constant 0 : index
    %360 = vector.load %arg7[%c2_347, %c0_348, %c0_349] : memref<10x4x128xf32, #tpu.memory_space<vmem>>, vector<4x4x128xf32>
    %361 = vector.shape_cast %359 : vector<128xf32> to vector<1x1x128xf32>
    %362 = vector.broadcast %361 : vector<1x1x128xf32> to vector<4x4x128xf32>
    %363 = arith.mulf %360, %362 : vector<4x4x128xf32>
    %364 = arith.addf %357, %363 : vector<4x4x128xf32>
    %c3_350 = arith.constant 3 : index
    %c6_351 = arith.constant 6 : index
    %c0_352 = arith.constant 0 : index
    %365 = vector.load %arg3[%c3_350, %c6_351, %c0_352] : memref<7x7x128xf32, #tpu.memory_space<vmem>>, vector<1x1x128xf32>
    %366 = vector.shape_cast %365 : vector<1x1x128xf32> to vector<128xf32>
    %c3_353 = arith.constant 3 : index
    %c0_354 = arith.constant 0 : index
    %c0_355 = arith.constant 0 : index
    %367 = vector.load %arg7[%c3_353, %c0_354, %c0_355] : memref<10x4x128xf32, #tpu.memory_space<vmem>>, vector<4x4x128xf32>
    %368 = vector.shape_cast %366 : vector<128xf32> to vector<1x1x128xf32>
    %369 = vector.broadcast %368 : vector<1x1x128xf32> to vector<4x4x128xf32>
    %370 = arith.mulf %367, %369 : vector<4x4x128xf32>
    %371 = arith.addf %364, %370 : vector<4x4x128xf32>
    %c4_356 = arith.constant 4 : index
    %c6_357 = arith.constant 6 : index
    %c0_358 = arith.constant 0 : index
    %372 = vector.load %arg3[%c4_356, %c6_357, %c0_358] : memref<7x7x128xf32, #tpu.memory_space<vmem>>, vector<1x1x128xf32>
    %373 = vector.shape_cast %372 : vector<1x1x128xf32> to vector<128xf32>
    %c4_359 = arith.constant 4 : index
    %c0_360 = arith.constant 0 : index
    %c0_361 = arith.constant 0 : index
    %374 = vector.load %arg7[%c4_359, %c0_360, %c0_361] : memref<10x4x128xf32, #tpu.memory_space<vmem>>, vector<4x4x128xf32>
    %375 = vector.shape_cast %373 : vector<128xf32> to vector<1x1x128xf32>
    %376 = vector.broadcast %375 : vector<1x1x128xf32> to vector<4x4x128xf32>
    %377 = arith.mulf %374, %376 : vector<4x4x128xf32>
    %378 = arith.addf %371, %377 : vector<4x4x128xf32>
    %c5_362 = arith.constant 5 : index
    %c6_363 = arith.constant 6 : index
    %c0_364 = arith.constant 0 : index
    %379 = vector.load %arg3[%c5_362, %c6_363, %c0_364] : memref<7x7x128xf32, #tpu.memory_space<vmem>>, vector<1x1x128xf32>
    %380 = vector.shape_cast %379 : vector<1x1x128xf32> to vector<128xf32>
    %c5_365 = arith.constant 5 : index
    %c0_366 = arith.constant 0 : index
    %c0_367 = arith.constant 0 : index
    %381 = vector.load %arg7[%c5_365, %c0_366, %c0_367] : memref<10x4x128xf32, #tpu.memory_space<vmem>>, vector<4x4x128xf32>
    %382 = vector.shape_cast %380 : vector<128xf32> to vector<1x1x128xf32>
    %383 = vector.broadcast %382 : vector<1x1x128xf32> to vector<4x4x128xf32>
    %384 = arith.mulf %381, %383 : vector<4x4x128xf32>
    %385 = arith.addf %378, %384 : vector<4x4x128xf32>
    %c6_368 = arith.constant 6 : index
    %c6_369 = arith.constant 6 : index
    %c0_370 = arith.constant 0 : index
    %386 = vector.load %arg3[%c6_368, %c6_369, %c0_370] : memref<7x7x128xf32, #tpu.memory_space<vmem>>, vector<1x1x128xf32>
    %387 = vector.shape_cast %386 : vector<1x1x128xf32> to vector<128xf32>
    %c6_371 = arith.constant 6 : index
    %c0_372 = arith.constant 0 : index
    %c0_373 = arith.constant 0 : index
    %388 = vector.load %arg7[%c6_371, %c0_372, %c0_373] : memref<10x4x128xf32, #tpu.memory_space<vmem>>, vector<4x4x128xf32>
    %389 = vector.shape_cast %387 : vector<128xf32> to vector<1x1x128xf32>
    %390 = vector.broadcast %389 : vector<1x1x128xf32> to vector<4x4x128xf32>
    %391 = arith.mulf %388, %390 : vector<4x4x128xf32>
    %392 = arith.addf %385, %391 : vector<4x4x128xf32>
    %393 = vector.extract_strided_slice %392 {offsets = [0, 0, 0], sizes = [1, 4, 128], strides = [1, 1, 1]} : vector<4x4x128xf32> to vector<1x4x128xf32>
    %394 = vector.shape_cast %393 : vector<1x4x128xf32> to vector<4x128xf32>
    %c0_374 = arith.constant 0 : index
    %c1_375 = arith.constant 1 : index
    %c0_376 = arith.constant 0 : index
    %395 = vector.load %arg5[%c0_374, %c1_375, %c0_376] : memref<1x17x128xf32, #tpu.memory_space<vmem>>, vector<1x4x128xf32>
    %396 = vector.shape_cast %395 : vector<1x4x128xf32> to vector<4x128xf32>
    %397 = vector.shape_cast %394 : vector<4x128xf32> to vector<1x4x128xf32>
    tpu.vector_store %arg5[%c0_374, %c1_375, %c0_376], %397 {strides = array<i32>} : memref<1x17x128xf32, #tpu.memory_space<vmem>>, vector<1x4x128xf32>,
    %398 = vector.extract_strided_slice %392 {offsets = [1, 0, 0], sizes = [1, 4, 128], strides = [1, 1, 1]} : vector<4x4x128xf32> to vector<1x4x128xf32>
    %399 = vector.shape_cast %398 : vector<1x4x128xf32> to vector<4x128xf32>
    %c0_377 = arith.constant 0 : index
    %c5_378 = arith.constant 5 : index
    %c0_379 = arith.constant 0 : index
    %400 = vector.load %arg5[%c0_377, %c5_378, %c0_379] : memref<1x17x128xf32, #tpu.memory_space<vmem>>, vector<1x4x128xf32>
    %401 = vector.shape_cast %400 : vector<1x4x128xf32> to vector<4x128xf32>
    %402 = vector.shape_cast %399 : vector<4x128xf32> to vector<1x4x128xf32>
    tpu.vector_store %arg5[%c0_377, %c5_378, %c0_379], %402 {strides = array<i32>} : memref<1x17x128xf32, #tpu.memory_space<vmem>>, vector<1x4x128xf32>,
    %403 = vector.extract_strided_slice %392 {offsets = [2, 0, 0], sizes = [1, 4, 128], strides = [1, 1, 1]} : vector<4x4x128xf32> to vector<1x4x128xf32>
    %404 = vector.shape_cast %403 : vector<1x4x128xf32> to vector<4x128xf32>
    %c0_380 = arith.constant 0 : index
    %c9_381 = arith.constant 9 : index
    %c0_382 = arith.constant 0 : index
    %405 = vector.load %arg5[%c0_380, %c9_381, %c0_382] : memref<1x17x128xf32, #tpu.memory_space<vmem>>, vector<1x4x128xf32>
    %406 = vector.shape_cast %405 : vector<1x4x128xf32> to vector<4x128xf32>
    %407 = vector.shape_cast %404 : vector<4x128xf32> to vector<1x4x128xf32>
    tpu.vector_store %arg5[%c0_380, %c9_381, %c0_382], %407 {strides = array<i32>} : memref<1x17x128xf32, #tpu.memory_space<vmem>>, vector<1x4x128xf32>,
    %408 = vector.extract_strided_slice %392 {offsets = [3, 0, 0], sizes = [1, 4, 128], strides = [1, 1, 1]} : vector<4x4x128xf32> to vector<1x4x128xf32>
    %409 = vector.shape_cast %408 : vector<1x4x128xf32> to vector<4x128xf32>
    %c0_383 = arith.constant 0 : index
    %c13_384 = arith.constant 13 : index
    %c0_385 = arith.constant 0 : index
    %410 = vector.load %arg5[%c0_383, %c13_384, %c0_385] : memref<1x17x128xf32, #tpu.memory_space<vmem>>, vector<1x4x128xf32>
    %411 = vector.shape_cast %410 : vector<1x4x128xf32> to vector<4x128xf32>
    %412 = vector.shape_cast %409 : vector<4x128xf32> to vector<1x4x128xf32>
    tpu.vector_store %arg5[%c0_383, %c13_384, %c0_385], %412 {strides = array<i32>} : memref<1x17x128xf32, #tpu.memory_space<vmem>>, vector<1x4x128xf32>,
    return
  }
  func.func @transform_0(%arg0: i32, %arg1: i32) -> (i32, i32, i32) {
    %c0_i32 = arith.constant 0 : i32
    %c0_i32_0 = arith.constant 0 : i32
    return %arg0, %c0_i32, %arg1 : i32, i32, i32
  }
  func.func @transform_1(%arg0: i32, %arg1: i32) -> (i32, i32, i32) {
    %c0_i32 = arith.constant 0 : i32
    %c0_i32_0 = arith.constant 0 : i32
    %c0_i32_1 = arith.constant 0 : i32
    return %c0_i32, %c0_i32_0, %arg1 : i32, i32, i32
  }
  func.func @transform_2(%arg0: i32, %arg1: i32) -> (i32, i32, i32) {
    %c0_i32 = arith.constant 0 : i32
    %c0_i32_0 = arith.constant 0 : i32
    %c0_i32_1 = arith.constant 0 : i32
    return %c0_i32, %c0_i32_0, %arg1 : i32, i32, i32
  }
  func.func @transform_3(%arg0: i32, %arg1: i32) -> (i32, i32, i32) {
    %c0_i32 = arith.constant 0 : i32
    %c0_i32_0 = arith.constant 0 : i32
    return %arg0, %c0_i32, %arg1 : i32, i32, i32
  }
}

</mosaic_0001>

<llo_original>
// kernel: tpu_custom_call.1
$region0: #{tpu_custom_call.1}
  #allocation0 [shape = 'u32[]', space=smem, size = 0x4, offset = 0x4, fixed_abs, tag = 'smem constant byte address 0x4 - core index']
  #allocation1 [shape = 'u32[72,128]{1,0:T(1,128)}', space=vmem, size = 0x9000, scoped, tag = 'internal scratch']
  #allocation2 [shape = 'f32[10,10,128]{2,1,0:T(8,128)}', space=vmem, size = 0x14000, scoped, tag = 'scratch operand']
  #allocation3 [shape = 'f32[10,4,128]{2,1,0:T(4,128)}', space=vmem, size = 0x5000, scoped, tag = 'scratch operand']
  %s0 = inlined_call_operand.vmem [shape: f32[2,17,128], index: 0, kind: input, shape index: {}]
  %s1 = inlined_call_operand.vmem [shape: f32[7,7,128], index: 1, kind: input, shape index: {}]
  %s2 = inlined_call_operand.vmem [shape: f32[1,1,128], index: 2, kind: input, shape index: {}]
  %s3 = inlined_call_operand.vmem [shape: f32[2,17,128], index: 3, kind: output, shape index: {}]
  %s4 = sld [smem:[#allocation0]]
  $region45: #{tpu_custom_call.1} parent=0
    _
  %s6 = ssub.s32 1, %s4
  %s7 = scalar_select 0, %s6, %s4
  loop: start=0, step=1, limit=4
  $region2: #{tpu_custom_call.1} parent=0 // loop_pre_header
    _
  $region3: #{tpu_custom_call.1} parent=0 // loop_header
    %s9 = sphi 0, %s13
    %p10 = scmp.ge.s32.totalorder %s9, 4
    %s16 = sphi 0, %s28
    %s17 = sphi 0, %s24
    %s18 = sphi 0, %s16
    %s19 = sphi 0, %s17
    %s20 = sphi 0, %s18
    %s21 = sphi 0, %s19
    %s33 = sphi 0, %s35
    %s36 = sphi 0, %s33
    %s37 = sphi 0, %s36
    %s53 = sphi 0, %s37
    %s59 = sphi 0, %s61
    %s62 = sphi 0, %s59
    %s63 = sphi 0, %s62
    %s79 = sphi 0, %s63
    %s85 = sphi 0, %s87
    %s88 = sphi 0, %s85
    %s89 = sphi 0, %s88
    %s105 = sphi 0, %s89
    %s113 = sphi 0, %s115
    %s116 = sphi 0, %s113
    %s117 = sphi 0, %s116
    %s133 = sphi 0, %s117
  $region4: #{tpu_custom_call.1} parent=0 // loop_header_branch
    %12 = sbr.rel (%p10) target = $region8
  $region5: #{tpu_custom_call.1} parent=0 // loop_body
    %s14 = ssub.s32 %s9, 1
    %s15 = ssub.s32 %s9, 2
    %s22 = sadd.s32 1, %s17
    %p23 = scmp.ge.s32.totalorder %s22, 1
    %s24 = scalar_select %p23, 0, %s22
    %s25 = sadd.s32 1, %s16
    %s26 = scalar_select %p23, %s25, %s16
    %p27 = scmp.ge.s32.totalorder %s26, 2
    %s28 = scalar_select %p27, 0, %s26
    %s29 = ssub.s32 %s16, %s28
    %s30 = ssub.s32 %s17, %s24
    %s31 = sor.u32 %s29, %s30
    %p32 = scmp.eq.s32.totalorder %s31, 0
    %s34 = sadd.s32 %s33, 1
    %s35 = scalar_select %p32, %s33, %s34
    %p38 = pneg %p32
    %p39 = scmp.eq.s32.totalorder %s9, 1
    %p40 = por %p38, %p39
    %p41 = scmp.ne.s32.totalorder %s33, %s36
    %p42 = scmp.eq.s32.totalorder %s9, 0
    %p43 = por %p41, %p42
    %p44 = scmp.ne.s32.totalorder %s33, %s36
    %p45 = scmp.eq.s32.totalorder %s14, 1
    %p46 = por %p44, %p45
    %p47 = scmp.ne.s32.totalorder %s36, %s37
    %p48 = scmp.eq.s32.totalorder %s14, 0
    %p49 = por %p47, %p48
    %p50 = scmp.ne.s32.totalorder %s36, %s37
    %p51 = scmp.eq.s32.totalorder %s15, 1
    %p52 = por %p50, %p51
    %p54 = scmp.ne.s32.totalorder %s37, %s53
    %p55 = scmp.eq.s32.totalorder %s15, 0
    %p56 = por %p54, %p55
    %s57 = ssub.s32 %s17, %s24
    %p58 = scmp.eq.s32.totalorder %s57, 0
    %s60 = sadd.s32 %s59, 1
    %s61 = scalar_select %p58, %s59, %s60
    %p64 = pneg %p58
    %p65 = scmp.eq.s32.totalorder %s9, 1
    %p66 = por %p64, %p65
    %p67 = scmp.ne.s32.totalorder %s59, %s62
    %p68 = scmp.eq.s32.totalorder %s9, 0
    %p69 = por %p67, %p68
    %p70 = scmp.ne.s32.totalorder %s59, %s62
    %p71 = scmp.eq.s32.totalorder %s14, 1
    %p72 = por %p70, %p71
    %p73 = scmp.ne.s32.totalorder %s62, %s63
    %p74 = scmp.eq.s32.totalorder %s14, 0
    %p75 = por %p73, %p74
    %p76 = scmp.ne.s32.totalorder %s62, %s63
    %p77 = scmp.eq.s32.totalorder %s15, 1
    %p78 = por %p76, %p77
    %p80 = scmp.ne.s32.totalorder %s63, %s79
    %p81 = scmp.eq.s32.totalorder %s15, 0
    %p82 = por %p80, %p81
    %s83 = ssub.s32 %s17, %s24
    %p84 = scmp.eq.s32.totalorder %s83, 0
    %s86 = sadd.s32 %s85, 1
    %s87 = scalar_select %p84, %s85, %s86
    %p90 = pneg %p84
    %p91 = scmp.eq.s32.totalorder %s9, 1
    %p92 = por %p90, %p91
    %p93 = scmp.ne.s32.totalorder %s85, %s88
    %p94 = scmp.eq.s32.totalorder %s9, 0
    %p95 = por %p93, %p94
    %p96 = scmp.ne.s32.totalorder %s85, %s88
    %p97 = scmp.eq.s32.totalorder %s14, 1
    %p98 = por %p96, %p97
    %p99 = scmp.ne.s32.totalorder %s88, %s89
    %p100 = scmp.eq.s32.totalorder %s14, 0
    %p101 = por %p99, %p100
    %p102 = scmp.ne.s32.totalorder %s88, %s89
    %p103 = scmp.eq.s32.totalorder %s15, 1
    %p104 = por %p102, %p103
    %p106 = scmp.ne.s32.totalorder %s89, %s105
    %p107 = scmp.eq.s32.totalorder %s15, 0
    %p108 = por %p106, %p107
    %s109 = ssub.s32 %s16, %s28
    %s110 = ssub.s32 %s17, %s24
    %s111 = sor.u32 %s109, %s110
    %p112 = scmp.eq.s32.totalorder %s111, 0
    %s114 = sadd.s32 %s113, 1
    %s115 = scalar_select %p112, %s113, %s114
    %p118 = pneg %p112
    %p119 = scmp.eq.s32.totalorder %s9, 1
    %p120 = por %p118, %p119
    %p121 = scmp.ne.s32.totalorder %s113, %s116
    %p122 = scmp.eq.s32.totalorder %s9, 0
    %p123 = por %p121, %p122
    %p124 = scmp.ne.s32.totalorder %s113, %s116
    %p125 = scmp.eq.s32.totalorder %s14, 1
    %p126 = por %p124, %p125
    %p127 = scmp.ne.s32.totalorder %s116, %s117
    %p128 = scmp.eq.s32.totalorder %s14, 0
    %p129 = por %p127, %p128
    %p130 = scmp.ne.s32.totalorder %s116, %s117
    %p131 = scmp.eq.s32.totalorder %s15, 1
    %p132 = por %p130, %p131
    %p134 = scmp.ne.s32.totalorder %s117, %s133
    %p135 = scmp.eq.s32.totalorder %s15, 0
    %p136 = por %p134, %p135
    %p137 = scmp.le.s32.totalorder 1, %s9
    %p138 = scmp.lt.s32.totalorder %s9, 3
    %p139 = pnand %p137, %p138
    %p140 = pneg %p139
    // Predicated region
    $region9: #{tpu_custom_call.1} parent=5 // pred_check
      _
    $region10: #{tpu_custom_call.1} parent=5 // pred_check_branch
      %142 = sbr.rel (%p139) target = $region12
    $region11: #{tpu_custom_call.1} parent=5 // pred_region
      %s143 = ssub.s32 %s9, 1
      // Predicated region
      $region13: #{tpu_custom_call.1} parent=11 // pred_check
        %p144 = pneg %p75
      $region14: #{tpu_custom_call.1} parent=11 // pred_check_branch
        %146 = sbr.rel (%p144) target = $region16
      $region15: #{tpu_custom_call.1} parent=11 // pred_region
        %p147 = scmp.lt.s32.totalorder %s19, 0
        %s148 = scalar_select %p147, %s19, 0
        %s149 = smul.addr %s148, 8
        %s150 = scalar_lea.vmem %s1, %s149
      $region16: #{tpu_custom_call.1} parent=11 // pred_fallthru
        _
      // Predicated region
      $region17: #{tpu_custom_call.1} parent=11 // pred_check
        %p151 = pneg %p101
      $region18: #{tpu_custom_call.1} parent=11 // pred_check_branch
        %153 = sbr.rel (%p151) target = $region20
      $region19: #{tpu_custom_call.1} parent=11 // pred_region
        %p154 = scmp.lt.s32.totalorder %s19, 0
        %s155 = scalar_select %p154, %s19, 0
        %s156 = scalar_lea.vmem %s2, %s155
      $region20: #{tpu_custom_call.1} parent=11 // pred_fallthru
        _
    $region12: #{tpu_custom_call.1} parent=5 // pred_fallthru
      _
    %p157 = scmp.lt.s32.totalorder %s9, 2
    // Predicated region
    $region21: #{tpu_custom_call.1} parent=5 // pred_check
      %p158 = pneg %p157
    $region22: #{tpu_custom_call.1} parent=5 // pred_check_branch
      %160 = sbr.rel (%p158) target = $region24
    $region23: #{tpu_custom_call.1} parent=5 // pred_region
      // Predicated region
      $region25: #{tpu_custom_call.1} parent=23 // pred_check
        %p161 = pneg %p43
      $region26: #{tpu_custom_call.1} parent=23 // pred_check_branch
        %163 = sbr.rel (%p161) target = $region28
      $region27: #{tpu_custom_call.1} parent=23 // pred_region
        %p164 = scmp.lt.s32.totalorder %s16, 1
        %s165 = scalar_select %p164, %s16, 1
        %p166 = scmp.lt.s32.totalorder %s17, 0
        %s167 = scalar_select %p166, %s17, 0
        %s168 = smul.addr %s165, 3
        %s169 = sadd.s32 %s167, %s168
        %s170 = smul.addr %s169, 8
        %s171 = scalar_lea.vmem %s0, %s170
      $region28: #{tpu_custom_call.1} parent=23 // pred_fallthru
        _
    $region24: #{tpu_custom_call.1} parent=5 // pred_fallthru
      _
    %p172 = scmp.le.s32.totalorder 1, %s9
    %p173 = scmp.lt.s32.totalorder %s9, 3
    %p174 = pnand %p172, %p173
    %p175 = pneg %p174
    // Predicated region
    $region29: #{tpu_custom_call.1} parent=5 // pred_check
      _
    $region30: #{tpu_custom_call.1} parent=5 // pred_check_branch
      %177 = sbr.rel (%p174) target = $region32
    $region31: #{tpu_custom_call.1} parent=5 // pred_region
      %s178 = ssub.s32 %s9, 1
      %p179 = scmp.lt.s32.totalorder %s18, 1
      %s180 = scalar_select %p179, %s18, 1
      %p181 = scmp.lt.s32.totalorder %s19, 0
      %s182 = scalar_select %p181, %s19, 0
      %s183 = smul.addr %s180, 3
      %s184 = sadd.s32 %s182, %s183
      %s185 = smul.addr %s184, 8
      %s186 = scalar_lea.vmem %s0, %s185
      %p187 = pneg %p49
      %p188 = pneg %p46
      %p189 = scmp.lt.s32.totalorder %s19, 0
      %s190 = scalar_select %p189, %s19, 0
      %s191 = smul.addr %s190, 8
      %s192 = scalar_lea.vmem %s1, %s191
      %p193 = pneg %p75
      %p194 = pneg %p72
      %p195 = scmp.lt.s32.totalorder %s19, 0
      %s196 = scalar_select %p195, %s19, 0
      %s197 = scalar_lea.vmem %s2, %s196
      %p198 = pneg %p101
      %p199 = pneg %p98
      %p200 = pneg %p129
      %p201 = pneg %p126
      %p202 = scmp.lt.s32.totalorder %s18, 1
      %s203 = scalar_select %p202, %s18, 1
      %p204 = scmp.lt.s32.totalorder %s19, 0
      %s205 = scalar_select %p204, %s19, 0
      %s206 = smul.addr %s203, 3
      %s207 = sadd.s32 %s205, %s206
      %s208 = smul.addr %s207, 8
      %s209 = scalar_lea.vmem %s3, %s208
      %p210 = scmp.lt.s32.totalorder %s18, 1
      %s211 = scalar_select %p210, %s18, 1
      %p212 = scmp.lt.s32.totalorder %s19, 0
      %s213 = scalar_select %p212, %s19, 0
      %s214 = smul.addr %s211, 3
      %s215 = sadd.s32 %s213, %s214
      %s216 = smul.addr %s215, 8
      %s217 = scalar_lea.vmem %s0, %s216
      %p218 = scmp.lt.s32.totalorder %s19, 0
      %s219 = scalar_select %p218, %s19, 0
      %s220 = smul.addr %s219, 8
      %s221 = scalar_lea.vmem %s1, %s220
      %p222 = scmp.lt.s32.totalorder %s19, 0
      %s223 = scalar_select %p222, %s19, 0
      %s224 = scalar_lea.vmem %s2, %s223
      %p225 = scmp.lt.s32.totalorder %s18, 1
      %s226 = scalar_select %p225, %s18, 1
      %p227 = scmp.lt.s32.totalorder %s19, 0
      %s228 = scalar_select %p227, %s19, 0
      %s229 = smul.addr %s226, 3
      %s230 = sadd.s32 %s228, %s229
      %s231 = smul.addr %s230, 8
      %s232 = scalar_lea.vmem %s3, %s231
      %v233 = vld [vmem:[%s217] sm:$0x1]
      %234 = vst [vmem:[%s232] sm:$0x1] %v233
      %235 = vst [vmem:[#allocation2] sm:$0xff] 0.0
      %236 = vst [vmem:[#allocation2 + $0x8] sm:$0x3] 0.0
      %237 = vst [vmem:[#allocation2 + $0x10] sm:$0xff] 0.0
      %238 = vst [vmem:[#allocation2 + $0x18] sm:$0x3] 0.0
      %239 = vst [vmem:[#allocation2 + $0x20] sm:$0xff] 0.0
      %240 = vst [vmem:[#allocation2 + $0x28] sm:$0x3] 0.0
      %s241 = scalar_lea.vmem [#allocation2], 112
      %242 = vst [vmem:[%s241] sm:$0xff] 0.0
      %243 = vst [vmem:[%s241 + $0x8] sm:$0x3] 0.0
      %244 = vst [vmem:[%s241 + $0x10] sm:$0xff] 0.0
      %245 = vst [vmem:[%s241 + $0x18] sm:$0x3] 0.0
      %246 = vst [vmem:[%s241 + $0x20] sm:$0xff] 0.0
      %247 = vst [vmem:[%s241 + $0x28] sm:$0x3] 0.0
      %s248 = scalar_lea.vmem [#allocation2], 48
      %249 = vst [vmem:[%s248] sm:$0x7] 0.0
      %250 = vst [vmem:[%s248 + $0x10] sm:$0x7] 0.0
      %251 = vst [vmem:[%s248 + $0x20] sm:$0x7] 0.0
      %252 = vst [vmem:[%s248 + $0x30] sm:$0x7] 0.0
      %253 = vst [vmem:[%s248 + $0x7] sm:$0x7] 0.0
      %254 = vst [vmem:[%s248 + $0x17] sm:$0x7] 0.0
      %255 = vst [vmem:[%s248 + $0x27] sm:$0x7] 0.0
      %256 = vst [vmem:[%s248 + $0x37] sm:$0x7] 0.0
      %v257 = vld [vmem:[%s217 + $0x1] sm:$0xf]
      %258 = vst [vmem:[%s248 + $0x3] sm:$0xf] %v257
      %v259 = vld [vmem:[%s217 + $0x5] sm:$0xf]
      %s260 = scalar_lea.vmem [#allocation2], 64
      %261 = vst [vmem:[%s260 + $0x3] sm:$0xf] %v259
      %v262 = vld [vmem:[%s217 + $0x9] sm:$0xf]
      %s263 = scalar_lea.vmem [#allocation2], 80
      %264 = vst [vmem:[%s263 + $0x3] sm:$0xf] %v262
      %v265 = vld [vmem:[%s217 + $0xd] sm:$0xf]
      %s266 = scalar_lea.vmem [#allocation2], 96
      %267 = vst [vmem:[%s266 + $0x3] sm:$0xf] %v265
      %v268 = vld [vmem:[%s224] sm:$0x1]
      %v270 = vperm.slane %v268, 0
      %v272 = vld [vmem:[#allocation2] sm:$0xf]
      %v273 = vld [vmem:[#allocation2 + $0x10] sm:$0xf]
      %v274 = vld [vmem:[#allocation2 + $0x20] sm:$0xf]
      %v275 = vld [vmem:[#allocation2 + $0x30] sm:$0xf]
      %v276 = vld [vmem:[#allocation2 + $0x40] sm:$0xf]
      %v277 = vld [vmem:[#allocation2 + $0x50] sm:$0xf]
      %v278 = vld [vmem:[#allocation2 + $0x60] sm:$0xf]
      %v279 = vld [vmem:[#allocation2 + $0x70] sm:$0xf]
      %v280 = vld [vmem:[#allocation2 + $0x80] sm:$0xf]
      %v281 = vld [vmem:[#allocation2 + $0x90] sm:$0xf]
      %282 = vst [vmem:[#allocation3] sm:$0xf] %v272
      %283 = vst [vmem:[#allocation3 + $0x4] sm:$0xf] %v273
      %284 = vst [vmem:[#allocation3 + $0x8] sm:$0xf] %v274
      %285 = vst [vmem:[#allocation3 + $0xc] sm:$0xf] %v275
      %286 = vst [vmem:[#allocation3 + $0x10] sm:$0xf] %v276
      %287 = vst [vmem:[#allocation3 + $0x14] sm:$0xf] %v277
      %288 = vst [vmem:[#allocation3 + $0x18] sm:$0xf] %v278
      %289 = vst [vmem:[#allocation3 + $0x1c] sm:$0xf] %v279
      %290 = vst [vmem:[#allocation3 + $0x20] sm:$0xf] %v280
      %291 = vst [vmem:[#allocation3 + $0x24] sm:$0xf] %v281
      %v292 = vld [vmem:[%s221] sm:$0x1]
      %v293 = vld [vmem:[#allocation3] sm:$0xf]
      %v294 = vld [vmem:[#allocation3 + $0x4] sm:$0xf]
      %v295 = vld [vmem:[#allocation3 + $0x8] sm:$0xf]
      %v296 = vld [vmem:[#allocation3 + $0xc] sm:$0xf]
      %v297 = vperm.slane %v292, 0
      %v298 = vmul.f32 %v293, %v297
      %v299 = vmul.f32 %v294, %v297
      %v300 = vmul.f32 %v295, %v297
      %v301 = vmul.f32 %v296, %v297
      %v302 = vadd.f32 %v270, %v298
      %v303 = vadd.f32 %v270, %v299
      %v304 = vadd.f32 %v270, %v300
      %v305 = vadd.f32 %v270, %v301
      %s306 = scalar_lea.vmem %s221, 8
      %v307 = vld [vmem:[%s306] sm:$0x1]
      %s308 = scalar_lea.vmem [#allocation3], 4
      %v309 = vld [vmem:[%s308] sm:$0xf]
      %v310 = vld [vmem:[%s308 + $0x4] sm:$0xf]
      %v311 = vld [vmem:[%s308 + $0x8] sm:$0xf]
      %v312 = vld [vmem:[%s308 + $0xc] sm:$0xf]
      %v313 = vperm.slane %v307, 0
      %v314 = vmul.f32 %v309, %v313
      %v315 = vmul.f32 %v310, %v313
      %v316 = vmul.f32 %v311, %v313
      %v317 = vmul.f32 %v312, %v313
      %v318 = vadd.f32 %v302, %v314
      %v319 = vadd.f32 %v303, %v315
      %v320 = vadd.f32 %v304, %v316
      %v321 = vadd.f32 %v305, %v317
      %s322 = scalar_lea.vmem %s221, 16
      %v323 = vld [vmem:[%s322] sm:$0x1]
      %s324 = scalar_lea.vmem [#allocation3], 8
      %v325 = vld [vmem:[%s324] sm:$0xf]
      %v326 = vld [vmem:[%s324 + $0x4] sm:$0xf]
      %v327 = vld [vmem:[%s324 + $0x8] sm:$0xf]
      %v328 = vld [vmem:[%s324 + $0xc] sm:$0xf]
      %v329 = vperm.slane %v323, 0
      %v330 = vmul.f32 %v325, %v329
      %v331 = vmul.f32 %v326, %v329
      %v332 = vmul.f32 %v327, %v329
      %v333 = vmul.f32 %v328, %v329
      %v334 = vadd.f32 %v318, %v330
      %v335 = vadd.f32 %v319, %v331
      %v336 = vadd.f32 %v320, %v332
      %v337 = vadd.f32 %v321, %v333
      %s338 = scalar_lea.vmem %s221, 24
      %v339 = vld [vmem:[%s338] sm:$0x1]
      %s340 = scalar_lea.vmem [#allocation3], 12
      %v341 = vld [vmem:[%s340] sm:$0xf]
      %v342 = vld [vmem:[%s340 + $0x4] sm:$0xf]
      %v343 = vld [vmem:[%s340 + $0x8] sm:$0xf]
      %v344 = vld [vmem:[%s340 + $0xc] sm:$0xf]
      %v345 = vperm.slane %v339, 0
      %v346 = vmul.f32 %v341, %v345
      %v347 = vmul.f32 %v342, %v345
      %v348 = vmul.f32 %v343, %v345
      %v349 = vmul.f32 %v344, %v345
      %v350 = vadd.f32 %v334, %v346
      %v351 = vadd.f32 %v335, %v347
      %v352 = vadd.f32 %v336, %v348
      %v353 = vadd.f32 %v337, %v349
      %s354 = scalar_lea.vmem %s221, 32
      %v355 = vld [vmem:[%s354] sm:$0x1]
      %s356 = scalar_lea.vmem [#allocation3], 16
      %v357 = vld [vmem:[%s356] sm:$0xf]
      %v358 = vld [vmem:[%s356 + $0x4] sm:$0xf]
      %v359 = vld [vmem:[%s356 + $0x8] sm:$0xf]
      %v360 = vld [vmem:[%s356 + $0xc] sm:$0xf]
      %v361 = vperm.slane %v355, 0
      %v362 = vmul.f32 %v357, %v361
      %v363 = vmul.f32 %v358, %v361
      %v364 = vmul.f32 %v359, %v361
      %v365 = vmul.f32 %v360, %v361
      %v366 = vadd.f32 %v350, %v362
      %v367 = vadd.f32 %v351, %v363
      %v368 = vadd.f32 %v352, %v364
      %v369 = vadd.f32 %v353, %v365
      %s370 = scalar_lea.vmem %s221, 40
      %v371 = vld [vmem:[%s370] sm:$0x1]
      %s372 = scalar_lea.vmem [#allocation3], 20
      %v373 = vld [vmem:[%s372] sm:$0xf]
      %v374 = vld [vmem:[%s372 + $0x4] sm:$0xf]
      %v375 = vld [vmem:[%s372 + $0x8] sm:$0xf]
      %v376 = vld [vmem:[%s372 + $0xc] sm:$0xf]
      %v377 = vperm.slane %v371, 0
      %v378 = vmul.f32 %v373, %v377
      %v379 = vmul.f32 %v374, %v377
      %v380 = vmul.f32 %v375, %v377
      %v381 = vmul.f32 %v376, %v377
      %v382 = vadd.f32 %v366, %v378
      %v383 = vadd.f32 %v367, %v379
      %v384 = vadd.f32 %v368, %v380
      %v385 = vadd.f32 %v369, %v381
      %s386 = scalar_lea.vmem %s221, 48
      %v387 = vld [vmem:[%s386] sm:$0x1]
      %s388 = scalar_lea.vmem [#allocation3], 24
      %v389 = vld [vmem:[%s388] sm:$0xf]
      %v390 = vld [vmem:[%s388 + $0x4] sm:$0xf]
      %v391 = vld [vmem:[%s388 + $0x8] sm:$0xf]
      %v392 = vld [vmem:[%s388 + $0xc] sm:$0xf]
      %v393 = vperm.slane %v387, 0
      %v394 = vmul.f32 %v389, %v393
      %v395 = vmul.f32 %v390, %v393
      %v396 = vmul.f32 %v391, %v393
      %v397 = vmul.f32 %v392, %v393
      %v398 = vadd.f32 %v382, %v394
      %v399 = vadd.f32 %v383, %v395
      %v400 = vadd.f32 %v384, %v396
      %v401 = vadd.f32 %v385, %v397
      %v402 = vld [vmem:[#allocation2 + $0x1] sm:$0xf]
      %v403 = vld [vmem:[#allocation2 + $0x11] sm:$0xf]
      %v404 = vld [vmem:[#allocation2 + $0x21] sm:$0xf]
      %v405 = vld [vmem:[#allocation2 + $0x31] sm:$0xf]
      %v406 = vld [vmem:[#allocation2 + $0x41] sm:$0xf]
      %v407 = vld [vmem:[#allocation2 + $0x51] sm:$0xf]
      %v408 = vld [vmem:[#allocation2 + $0x61] sm:$0xf]
      %v409 = vld [vmem:[#allocation2 + $0x71] sm:$0xf]
      %v410 = vld [vmem:[#allocation2 + $0x81] sm:$0xf]
      %v411 = vld [vmem:[#allocation2 + $0x91] sm:$0xf]
      %412 = vst [vmem:[#allocation3] sm:$0xf] %v402
      %413 = vst [vmem:[#allocation3 + $0x4] sm:$0xf] %v403
      %414 = vst [vmem:[#allocation3 + $0x8] sm:$0xf] %v404
      %415 = vst [vmem:[#allocation3 + $0xc] sm:$0xf] %v405
      %416 = vst [vmem:[#allocation3 + $0x10] sm:$0xf] %v406
      %417 = vst [vmem:[#allocation3 + $0x14] sm:$0xf] %v407
      %418 = vst [vmem:[#allocation3 + $0x18] sm:$0xf] %v408
      %419 = vst [vmem:[#allocation3 + $0x1c] sm:$0xf] %v409
      %420 = vst [vmem:[#allocation3 + $0x20] sm:$0xf] %v410
      %421 = vst [vmem:[#allocation3 + $0x24] sm:$0xf] %v411
      %v422 = vld [vmem:[%s221 + $0x1] sm:$0x1]
      %v423 = vld [vmem:[#allocation3] sm:$0xf]
      %v424 = vld [vmem:[#allocation3 + $0x4] sm:$0xf]
      %v425 = vld [vmem:[#allocation3 + $0x8] sm:$0xf]
      %v426 = vld [vmem:[#allocation3 + $0xc] sm:$0xf]
      %v427 = vperm.slane %v422, 0
      %v428 = vmul.f32 %v423, %v427
      %v429 = vmul.f32 %v424, %v427
      %v430 = vmul.f32 %v425, %v427
      %v431 = vmul.f32 %v426, %v427
      %v432 = vadd.f32 %v398, %v428
      %v433 = vadd.f32 %v399, %v429
      %v434 = vadd.f32 %v400, %v430
      %v435 = vadd.f32 %v401, %v431
      %v436 = vld [vmem:[%s306 + $0x1] sm:$0x1]
      %v437 = vld [vmem:[%s308] sm:$0xf]
      %v438 = vld [vmem:[%s308 + $0x4] sm:$0xf]
      %v439 = vld [vmem:[%s308 + $0x8] sm:$0xf]
      %v440 = vld [vmem:[%s308 + $0xc] sm:$0xf]
      %v441 = vperm.slane %v436, 0
      %v442 = vmul.f32 %v437, %v441
      %v443 = vmul.f32 %v438, %v441
      %v444 = vmul.f32 %v439, %v441
      %v445 = vmul.f32 %v440, %v441
      %v446 = vadd.f32 %v432, %v442
      %v447 = vadd.f32 %v433, %v443
      %v448 = vadd.f32 %v434, %v444
      %v449 = vadd.f32 %v435, %v445
      %v450 = vld [vmem:[%s322 + $0x1] sm:$0x1]
      %v451 = vld [vmem:[%s324] sm:$0xf]
      %v452 = vld [vmem:[%s324 + $0x4] sm:$0xf]
      %v453 = vld [vmem:[%s324 + $0x8] sm:$0xf]
      %v454 = vld [vmem:[%s324 + $0xc] sm:$0xf]
      %v455 = vperm.slane %v450, 0
      %v456 = vmul.f32 %v451, %v455
      %v457 = vmul.f32 %v452, %v455
      %v458 = vmul.f32 %v453, %v455
      %v459 = vmul.f32 %v454, %v455
      %v460 = vadd.f32 %v446, %v456
      %v461 = vadd.f32 %v447, %v457
      %v462 = vadd.f32 %v448, %v458
      %v463 = vadd.f32 %v449, %v459
      %v464 = vld [vmem:[%s338 + $0x1] sm:$0x1]
      %v465 = vld [vmem:[%s340] sm:$0xf]
      %v466 = vld [vmem:[%s340 + $0x4] sm:$0xf]
      %v467 = vld [vmem:[%s340 + $0x8] sm:$0xf]
      %v468 = vld [vmem:[%s340 + $0xc] sm:$0xf]
      %v469 = vperm.slane %v464, 0
      %v470 = vmul.f32 %v465, %v469
      %v471 = vmul.f32 %v466, %v469
      %v472 = vmul.f32 %v467, %v469
      %v473 = vmul.f32 %v468, %v469
      %v474 = vadd.f32 %v460, %v470
      %v475 = vadd.f32 %v461, %v471
      %v476 = vadd.f32 %v462, %v472
      %v477 = vadd.f32 %v463, %v473
      %v478 = vld [vmem:[%s354 + $0x1] sm:$0x1]
      %v479 = vld [vmem:[%s356] sm:$0xf]
      %v480 = vld [vmem:[%s356 + $0x4] sm:$0xf]
      %v481 = vld [vmem:[%s356 + $0x8] sm:$0xf]
      %v482 = vld [vmem:[%s356 + $0xc] sm:$0xf]
      %v483 = vperm.slane %v478, 0
      %v484 = vmul.f32 %v479, %v483
      %v485 = vmul.f32 %v480, %v483
      %v486 = vmul.f32 %v481, %v483
      %v487 = vmul.f32 %v482, %v483
      %v488 = vadd.f32 %v474, %v484
      %v489 = vadd.f32 %v475, %v485
      %v490 = vadd.f32 %v476, %v486
      %v491 = vadd.f32 %v477, %v487
      %v492 = vld [vmem:[%s370 + $0x1] sm:$0x1]
      %v493 = vld [vmem:[%s372] sm:$0xf]
      %v494 = vld [vmem:[%s372 + $0x4] sm:$0xf]
      %v495 = vld [vmem:[%s372 + $0x8] sm:$0xf]
      %v496 = vld [vmem:[%s372 + $0xc] sm:$0xf]
      %v497 = vperm.slane %v492, 0
      %v498 = vmul.f32 %v493, %v497
      %v499 = vmul.f32 %v494, %v497
      %v500 = vmul.f32 %v495, %v497
      %v501 = vmul.f32 %v496, %v497
      %v502 = vadd.f32 %v488, %v498
      %v503 = vadd.f32 %v489, %v499
      %v504 = vadd.f32 %v490, %v500
      %v505 = vadd.f32 %v491, %v501
      %v506 = vld [vmem:[%s386 + $0x1] sm:$0x1]
      %v507 = vld [vmem:[%s388] sm:$0xf]
      %v508 = vld [vmem:[%s388 + $0x4] sm:$0xf]
      %v509 = vld [vmem:[%s388 + $0x8] sm:$0xf]
      %v510 = vld [vmem:[%s388 + $0xc] sm:$0xf]
      %v511 = vperm.slane %v506, 0
      %v512 = vmul.f32 %v507, %v511
      %v513 = vmul.f32 %v508, %v511
      %v514 = vmul.f32 %v509, %v511
      %v515 = vmul.f32 %v510, %v511
      %v516 = vadd.f32 %v502, %v512
      %v517 = vadd.f32 %v503, %v513
      %v518 = vadd.f32 %v504, %v514
      %v519 = vadd.f32 %v505, %v515
      %v520 = vld [vmem:[#allocation2 + $0x2] sm:$0xf]
      %v521 = vld [vmem:[#allocation2 + $0x12] sm:$0xf]
      %v522 = vld [vmem:[#allocation2 + $0x22] sm:$0xf]
      %v523 = vld [vmem:[#allocation2 + $0x32] sm:$0xf]
      %v524 = vld [vmem:[#allocation2 + $0x42] sm:$0xf]
      %v525 = vld [vmem:[#allocation2 + $0x52] sm:$0xf]
      %v526 = vld [vmem:[#allocation2 + $0x62] sm:$0xf]
      %v527 = vld [vmem:[#allocation2 + $0x72] sm:$0xf]
      %v528 = vld [vmem:[#allocation2 + $0x82] sm:$0xf]
      %v529 = vld [vmem:[#allocation2 + $0x92] sm:$0xf]
      %530 = vst [vmem:[#allocation3] sm:$0xf] %v520
      %531 = vst [vmem:[#allocation3 + $0x4] sm:$0xf] %v521
      %532 = vst [vmem:[#allocation3 + $0x8] sm:$0xf] %v522
      %533 = vst [vmem:[#allocation3 + $0xc] sm:$0xf] %v523
      %534 = vst [vmem:[#allocation3 + $0x10] sm:$0xf] %v524
      %535 = vst [vmem:[#allocation3 + $0x14] sm:$0xf] %v525
      %536 = vst [vmem:[#allocation3 + $0x18] sm:$0xf] %v526
      %537 = vst [vmem:[#allocation3 + $0x1c] sm:$0xf] %v527
      %538 = vst [vmem:[#allocation3 + $0x20] sm:$0xf] %v528
      %539 = vst [vmem:[#allocation3 + $0x24] sm:$0xf] %v529
      %v540 = vld [vmem:[%s221 + $0x2] sm:$0x1]
      %v541 = vld [vmem:[#allocation3] sm:$0xf]
      %v542 = vld [vmem:[#allocation3 + $0x4] sm:$0xf]
      %v543 = vld [vmem:[#allocation3 + $0x8] sm:$0xf]
      %v544 = vld [vmem:[#allocation3 + $0xc] sm:$0xf]
      %v545 = vperm.slane %v540, 0
      %v546 = vmul.f32 %v541, %v545
      %v547 = vmul.f32 %v542, %v545
      %v548 = vmul.f32 %v543, %v545
      %v549 = vmul.f32 %v544, %v545
      %v550 = vadd.f32 %v516, %v546
      %v551 = vadd.f32 %v517, %v547
      %v552 = vadd.f32 %v518, %v548
      %v553 = vadd.f32 %v519, %v549
      %v554 = vld [vmem:[%s306 + $0x2] sm:$0x1]
      %v555 = vld [vmem:[%s308] sm:$0xf]
      %v556 = vld [vmem:[%s308 + $0x4] sm:$0xf]
      %v557 = vld [vmem:[%s308 + $0x8] sm:$0xf]
      %v558 = vld [vmem:[%s308 + $0xc] sm:$0xf]
      %v559 = vperm.slane %v554, 0
      %v560 = vmul.f32 %v555, %v559
      %v561 = vmul.f32 %v556, %v559
      %v562 = vmul.f32 %v557, %v559
      %v563 = vmul.f32 %v558, %v559
      %v564 = vadd.f32 %v550, %v560
      %v565 = vadd.f32 %v551, %v561
      %v566 = vadd.f32 %v552, %v562
      %v567 = vadd.f32 %v553, %v563
      %v568 = vld [vmem:[%s322 + $0x2] sm:$0x1]
      %v569 = vld [vmem:[%s324] sm:$0xf]
      %v570 = vld [vmem:[%s324 + $0x4] sm:$0xf]
      %v571 = vld [vmem:[%s324 + $0x8] sm:$0xf]
      %v572 = vld [vmem:[%s324 + $0xc] sm:$0xf]
      %v573 = vperm.slane %v568, 0
      %v574 = vmul.f32 %v569, %v573
      %v575 = vmul.f32 %v570, %v573
      %v576 = vmul.f32 %v571, %v573
      %v577 = vmul.f32 %v572, %v573
      %v578 = vadd.f32 %v564, %v574
      %v579 = vadd.f32 %v565, %v575
      %v580 = vadd.f32 %v566, %v576
      %v581 = vadd.f32 %v567, %v577
      %v582 = vld [vmem:[%s338 + $0x2] sm:$0x1]
      %v583 = vld [vmem:[%s340] sm:$0xf]
      %v584 = vld [vmem:[%s340 + $0x4] sm:$0xf]
      %v585 = vld [vmem:[%s340 + $0x8] sm:$0xf]
      %v586 = vld [vmem:[%s340 + $0xc] sm:$0xf]
      %v587 = vperm.slane %v582, 0
      %v588 = vmul.f32 %v583, %v587
      %v589 = vmul.f32 %v584, %v587
      %v590 = vmul.f32 %v585, %v587
      %v591 = vmul.f32 %v586, %v587
      %v592 = vadd.f32 %v578, %v588
      %v593 = vadd.f32 %v579, %v589
      %v594 = vadd.f32 %v580, %v590
      %v595 = vadd.f32 %v581, %v591
      %v596 = vld [vmem:[%s354 + $0x2] sm:$0x1]
      %v597 = vld [vmem:[%s356] sm:$0xf]
      %v598 = vld [vmem:[%s356 + $0x4] sm:$0xf]
      %v599 = vld [vmem:[%s356 + $0x8] sm:$0xf]
      %v600 = vld [vmem:[%s356 + $0xc] sm:$0xf]
      %v601 = vperm.slane %v596, 0
      %v602 = vmul.f32 %v597, %v601
      %v603 = vmul.f32 %v598, %v601
      %v604 = vmul.f32 %v599, %v601
      %v605 = vmul.f32 %v600, %v601
      %v606 = vadd.f32 %v592, %v602
      %v607 = vadd.f32 %v593, %v603
      %v608 = vadd.f32 %v594, %v604
      %v609 = vadd.f32 %v595, %v605
      %v610 = vld [vmem:[%s370 + $0x2] sm:$0x1]
      %v611 = vld [vmem:[%s372] sm:$0xf]
      %v612 = vld [vmem:[%s372 + $0x4] sm:$0xf]
      %v613 = vld [vmem:[%s372 + $0x8] sm:$0xf]
      %v614 = vld [vmem:[%s372 + $0xc] sm:$0xf]
      %v615 = vperm.slane %v610, 0
      %v616 = vmul.f32 %v611, %v615
      %v617 = vmul.f32 %v612, %v615
      %v618 = vmul.f32 %v613, %v615
      %v619 = vmul.f32 %v614, %v615
      %v620 = vadd.f32 %v606, %v616
      %v621 = vadd.f32 %v607, %v617
      %v622 = vadd.f32 %v608, %v618
      %v623 = vadd.f32 %v609, %v619
      %v624 = vld [vmem:[%s386 + $0x2] sm:$0x1]
      %v625 = vld [vmem:[%s388] sm:$0xf]
      %v626 = vld [vmem:[%s388 + $0x4] sm:$0xf]
      %v627 = vld [vmem:[%s388 + $0x8] sm:$0xf]
      %v628 = vld [vmem:[%s388 + $0xc] sm:$0xf]
      %v629 = vperm.slane %v624, 0
      %v630 = vmul.f32 %v625, %v629
      %v631 = vmul.f32 %v626, %v629
      %v632 = vmul.f32 %v627, %v629
      %v633 = vmul.f32 %v628, %v629
      %v634 = vadd.f32 %v620, %v630
      %v635 = vadd.f32 %v621, %v631
      %v636 = vadd.f32 %v622, %v632
      %v637 = vadd.f32 %v623, %v633
      %v638 = vld [vmem:[#allocation2 + $0x3] sm:$0xf]
      %v639 = vld [vmem:[#allocation2 + $0x13] sm:$0xf]
      %v640 = vld [vmem:[#allocation2 + $0x23] sm:$0xf]
      %v641 = vld [vmem:[#allocation2 + $0x33] sm:$0xf]
      %v642 = vld [vmem:[#allocation2 + $0x43] sm:$0xf]
      %v643 = vld [vmem:[#allocation2 + $0x53] sm:$0xf]
      %v644 = vld [vmem:[#allocation2 + $0x63] sm:$0xf]
      %v645 = vld [vmem:[#allocation2 + $0x73] sm:$0xf]
      %v646 = vld [vmem:[#allocation2 + $0x83] sm:$0xf]
      %v647 = vld [vmem:[#allocation2 + $0x93] sm:$0xf]
      %648 = vst [vmem:[#allocation3] sm:$0xf] %v638
      %649 = vst [vmem:[#allocation3 + $0x4] sm:$0xf] %v639
      %650 = vst [vmem:[#allocation3 + $0x8] sm:$0xf] %v640
      %651 = vst [vmem:[#allocation3 + $0xc] sm:$0xf] %v641
      %652 = vst [vmem:[#allocation3 + $0x10] sm:$0xf] %v642
      %653 = vst [vmem:[#allocation3 + $0x14] sm:$0xf] %v643
      %654 = vst [vmem:[#allocation3 + $0x18] sm:$0xf] %v644
      %655 = vst [vmem:[#allocation3 + $0x1c] sm:$0xf] %v645
      %656 = vst [vmem:[#allocation3 + $0x20] sm:$0xf] %v646
      %657 = vst [vmem:[#allocation3 + $0x24] sm:$0xf] %v647
      %v658 = vld [vmem:[%s221 + $0x3] sm:$0x1]
      %v659 = vld [vmem:[#allocation3] sm:$0xf]
      %v660 = vld [vmem:[#allocation3 + $0x4] sm:$0xf]
      %v661 = vld [vmem:[#allocation3 + $0x8] sm:$0xf]
      %v662 = vld [vmem:[#allocation3 + $0xc] sm:$0xf]
      %v663 = vperm.slane %v658, 0
      %v664 = vmul.f32 %v659, %v663
      %v665 = vmul.f32 %v660, %v663
      %v666 = vmul.f32 %v661, %v663
      %v667 = vmul.f32 %v662, %v663
      %v668 = vadd.f32 %v634, %v664
      %v669 = vadd.f32 %v635, %v665
      %v670 = vadd.f32 %v636, %v666
      %v671 = vadd.f32 %v637, %v667
      %v672 = vld [vmem:[%s306 + $0x3] sm:$0x1]
      %v673 = vld [vmem:[%s308] sm:$0xf]
      %v674 = vld [vmem:[%s308 + $0x4] sm:$0xf]
      %v675 = vld [vmem:[%s308 + $0x8] sm:$0xf]
      %v676 = vld [vmem:[%s308 + $0xc] sm:$0xf]
      %v677 = vperm.slane %v672, 0
      %v678 = vmul.f32 %v673, %v677
      %v679 = vmul.f32 %v674, %v677
      %v680 = vmul.f32 %v675, %v677
      %v681 = vmul.f32 %v676, %v677
      %v682 = vadd.f32 %v668, %v678
      %v683 = vadd.f32 %v669, %v679
      %v684 = vadd.f32 %v670, %v680
      %v685 = vadd.f32 %v671, %v681
      %v686 = vld [vmem:[%s322 + $0x3] sm:$0x1]
      %v687 = vld [vmem:[%s324] sm:$0xf]
      %v688 = vld [vmem:[%s324 + $0x4] sm:$0xf]
      %v689 = vld [vmem:[%s324 + $0x8] sm:$0xf]
      %v690 = vld [vmem:[%s324 + $0xc] sm:$0xf]
      %v691 = vperm.slane %v686, 0
      %v692 = vmul.f32 %v687, %v691
      %v693 = vmul.f32 %v688, %v691
      %v694 = vmul.f32 %v689, %v691
      %v695 = vmul.f32 %v690, %v691
      %v696 = vadd.f32 %v682, %v692
      %v697 = vadd.f32 %v683, %v693
      %v698 = vadd.f32 %v684, %v694
      %v699 = vadd.f32 %v685, %v695
      %v700 = vld [vmem:[%s338 + $0x3] sm:$0x1]
      %v701 = vld [vmem:[%s340] sm:$0xf]
      %v702 = vld [vmem:[%s340 + $0x4] sm:$0xf]
      %v703 = vld [vmem:[%s340 + $0x8] sm:$0xf]
      %v704 = vld [vmem:[%s340 + $0xc] sm:$0xf]
      %v705 = vperm.slane %v700, 0
      %v706 = vmul.f32 %v701, %v705
      %v707 = vmul.f32 %v702, %v705
      %v708 = vmul.f32 %v703, %v705
      %v709 = vmul.f32 %v704, %v705
      %v710 = vadd.f32 %v696, %v706
      %v711 = vadd.f32 %v697, %v707
      %v712 = vadd.f32 %v698, %v708
      %v713 = vadd.f32 %v699, %v709
      %v714 = vld [vmem:[%s354 + $0x3] sm:$0x1]
      %v715 = vld [vmem:[%s356] sm:$0xf]
      %v716 = vld [vmem:[%s356 + $0x4] sm:$0xf]
      %v717 = vld [vmem:[%s356 + $0x8] sm:$0xf]
      %v718 = vld [vmem:[%s356 + $0xc] sm:$0xf]
      %v719 = vperm.slane %v714, 0
      %v720 = vmul.f32 %v715, %v719
      %v721 = vmul.f32 %v716, %v719
      %v722 = vmul.f32 %v717, %v719
      %v723 = vmul.f32 %v718, %v719
      %v724 = vadd.f32 %v710, %v720
      %v725 = vadd.f32 %v711, %v721
      %v726 = vadd.f32 %v712, %v722
      %v727 = vadd.f32 %v713, %v723
      %v728 = vld [vmem:[%s370 + $0x3] sm:$0x1]
      %v729 = vld [vmem:[%s372] sm:$0xf]
      %v730 = vld [vmem:[%s372 + $0x4] sm:$0xf]
      %v731 = vld [vmem:[%s372 + $0x8] sm:$0xf]
      %v732 = vld [vmem:[%s372 + $0xc] sm:$0xf]
      %v733 = vperm.slane %v728, 0
      %v734 = vmul.f32 %v729, %v733
      %v735 = vmul.f32 %v730, %v733
      %v736 = vmul.f32 %v731, %v733
      %v737 = vmul.f32 %v732, %v733
      %v738 = vadd.f32 %v724, %v734
      %v739 = vadd.f32 %v725, %v735
      %v740 = vadd.f32 %v726, %v736
      %v741 = vadd.f32 %v727, %v737
      %v742 = vld [vmem:[%s386 + $0x3] sm:$0x1]
      %v743 = vld [vmem:[%s388] sm:$0xf]
      %v744 = vld [vmem:[%s388 + $0x4] sm:$0xf]
      %v745 = vld [vmem:[%s388 + $0x8] sm:$0xf]
      %v746 = vld [vmem:[%s388 + $0xc] sm:$0xf]
      %v747 = vperm.slane %v742, 0
      %v748 = vmul.f32 %v743, %v747
      %v749 = vmul.f32 %v744, %v747
      %v750 = vmul.f32 %v745, %v747
      %v751 = vmul.f32 %v746, %v747
      %v752 = vadd.f32 %v738, %v748
      %v753 = vadd.f32 %v739, %v749
      %v754 = vadd.f32 %v740, %v750
      %v755 = vadd.f32 %v741, %v751
      %v756 = vld [vmem:[#allocation2 + $0x4] sm:$0xf]
      %v757 = vld [vmem:[#allocation2 + $0x14] sm:$0xf]
      %v758 = vld [vmem:[#allocation2 + $0x24] sm:$0xf]
      %v759 = vld [vmem:[#allocation2 + $0x34] sm:$0xf]
      %v760 = vld [vmem:[#allocation2 + $0x44] sm:$0xf]
      %v761 = vld [vmem:[#allocation2 + $0x54] sm:$0xf]
      %v762 = vld [vmem:[#allocation2 + $0x64] sm:$0xf]
      %v763 = vld [vmem:[#allocation2 + $0x74] sm:$0xf]
      %v764 = vld [vmem:[#allocation2 + $0x84] sm:$0xf]
      %v765 = vld [vmem:[#allocation2 + $0x94] sm:$0xf]
      %766 = vst [vmem:[#allocation3] sm:$0xf] %v756
      %767 = vst [vmem:[#allocation3 + $0x4] sm:$0xf] %v757
      %768 = vst [vmem:[#allocation3 + $0x8] sm:$0xf] %v758
      %769 = vst [vmem:[#allocation3 + $0xc] sm:$0xf] %v759
      %770 = vst [vmem:[#allocation3 + $0x10] sm:$0xf] %v760
      %771 = vst [vmem:[#allocation3 + $0x14] sm:$0xf] %v761
      %772 = vst [vmem:[#allocation3 + $0x18] sm:$0xf] %v762
      %773 = vst [vmem:[#allocation3 + $0x1c] sm:$0xf] %v763
      %774 = vst [vmem:[#allocation3 + $0x20] sm:$0xf] %v764
      %775 = vst [vmem:[#allocation3 + $0x24] sm:$0xf] %v765
      %v776 = vld [vmem:[%s221 + $0x4] sm:$0x1]
      %v777 = vld [vmem:[#allocation3] sm:$0xf]
      %v778 = vld [vmem:[#allocation3 + $0x4] sm:$0xf]
      %v779 = vld [vmem:[#allocation3 + $0x8] sm:$0xf]
      %v780 = vld [vmem:[#allocation3 + $0xc] sm:$0xf]
      %v781 = vperm.slane %v776, 0
      %v782 = vmul.f32 %v777, %v781
      %v783 = vmul.f32 %v778, %v781
      %v784 = vmul.f32 %v779, %v781
      %v785 = vmul.f32 %v780, %v781
      %v786 = vadd.f32 %v752, %v782
      %v787 = vadd.f32 %v753, %v783
      %v788 = vadd.f32 %v754, %v784
      %v789 = vadd.f32 %v755, %v785
      %v790 = vld [vmem:[%s306 + $0x4] sm:$0x1]
      %v791 = vld [vmem:[%s308] sm:$0xf]
      %v792 = vld [vmem:[%s308 + $0x4] sm:$0xf]
      %v793 = vld [vmem:[%s308 + $0x8] sm:$0xf]
      %v794 = vld [vmem:[%s308 + $0xc] sm:$0xf]
      %v795 = vperm.slane %v790, 0
      %v796 = vmul.f32 %v791, %v795
      %v797 = vmul.f32 %v792, %v795
      %v798 = vmul.f32 %v793, %v795
      %v799 = vmul.f32 %v794, %v795
      %v800 = vadd.f32 %v786, %v796
      %v801 = vadd.f32 %v787, %v797
      %v802 = vadd.f32 %v788, %v798
      %v803 = vadd.f32 %v789, %v799
      %v804 = vld [vmem:[%s322 + $0x4] sm:$0x1]
      %v805 = vld [vmem:[%s324] sm:$0xf]
      %v806 = vld [vmem:[%s324 + $0x4] sm:$0xf]
      %v807 = vld [vmem:[%s324 + $0x8] sm:$0xf]
      %v808 = vld [vmem:[%s324 + $0xc] sm:$0xf]
      %v809 = vperm.slane %v804, 0
      %v810 = vmul.f32 %v805, %v809
      %v811 = vmul.f32 %v806, %v809
      %v812 = vmul.f32 %v807, %v809
      %v813 = vmul.f32 %v808, %v809
      %v814 = vadd.f32 %v800, %v810
      %v815 = vadd.f32 %v801, %v811
      %v816 = vadd.f32 %v802, %v812
      %v817 = vadd.f32 %v803, %v813
      %v818 = vld [vmem:[%s338 + $0x4] sm:$0x1]
      %v819 = vld [vmem:[%s340] sm:$0xf]
      %v820 = vld [vmem:[%s340 + $0x4] sm:$0xf]
      %v821 = vld [vmem:[%s340 + $0x8] sm:$0xf]
      %v822 = vld [vmem:[%s340 + $0xc] sm:$0xf]
      %v823 = vperm.slane %v818, 0
      %v824 = vmul.f32 %v819, %v823
      %v825 = vmul.f32 %v820, %v823
      %v826 = vmul.f32 %v821, %v823
      %v827 = vmul.f32 %v822, %v823
      %v828 = vadd.f32 %v814, %v824
      %v829 = vadd.f32 %v815, %v825
      %v830 = vadd.f32 %v816, %v826
      %v831 = vadd.f32 %v817, %v827
      %v832 = vld [vmem:[%s354 + $0x4] sm:$0x1]
      %v833 = vld [vmem:[%s356] sm:$0xf]
      %v834 = vld [vmem:[%s356 + $0x4] sm:$0xf]
      %v835 = vld [vmem:[%s356 + $0x8] sm:$0xf]
      %v836 = vld [vmem:[%s356 + $0xc] sm:$0xf]
      %v837 = vperm.slane %v832, 0
      %v838 = vmul.f32 %v833, %v837
      %v839 = vmul.f32 %v834, %v837
      %v840 = vmul.f32 %v835, %v837
      %v841 = vmul.f32 %v836, %v837
      %v842 = vadd.f32 %v828, %v838
      %v843 = vadd.f32 %v829, %v839
      %v844 = vadd.f32 %v830, %v840
      %v845 = vadd.f32 %v831, %v841
      %v846 = vld [vmem:[%s370 + $0x4] sm:$0x1]
      %v847 = vld [vmem:[%s372] sm:$0xf]
      %v848 = vld [vmem:[%s372 + $0x4] sm:$0xf]
      %v849 = vld [vmem:[%s372 + $0x8] sm:$0xf]
      %v850 = vld [vmem:[%s372 + $0xc] sm:$0xf]
      %v851 = vperm.slane %v846, 0
      %v852 = vmul.f32 %v847, %v851
      %v853 = vmul.f32 %v848, %v851
      %v854 = vmul.f32 %v849, %v851
      %v855 = vmul.f32 %v850, %v851
      %v856 = vadd.f32 %v842, %v852
      %v857 = vadd.f32 %v843, %v853
      %v858 = vadd.f32 %v844, %v854
      %v859 = vadd.f32 %v845, %v855
      %v860 = vld [vmem:[%s386 + $0x4] sm:$0x1]
      %v861 = vld [vmem:[%s388] sm:$0xf]
      %v862 = vld [vmem:[%s388 + $0x4] sm:$0xf]
      %v863 = vld [vmem:[%s388 + $0x8] sm:$0xf]
      %v864 = vld [vmem:[%s388 + $0xc] sm:$0xf]
      %v865 = vperm.slane %v860, 0
      %v866 = vmul.f32 %v861, %v865
      %v867 = vmul.f32 %v862, %v865
      %v868 = vmul.f32 %v863, %v865
      %v869 = vmul.f32 %v864, %v865
      %v870 = vadd.f32 %v856, %v866
      %v871 = vadd.f32 %v857, %v867
      %v872 = vadd.f32 %v858, %v868
      %v873 = vadd.f32 %v859, %v869
      %v874 = vld [vmem:[#allocation2 + $0x5] sm:$0xf]
      %v875 = vld [vmem:[#allocation2 + $0x15] sm:$0xf]
      %v876 = vld [vmem:[#allocation2 + $0x25] sm:$0xf]
      %v877 = vld [vmem:[#allocation2 + $0x35] sm:$0xf]
      %v878 = vld [vmem:[#allocation2 + $0x45] sm:$0xf]
      %v879 = vld [vmem:[#allocation2 + $0x55] sm:$0xf]
      %v880 = vld [vmem:[#allocation2 + $0x65] sm:$0xf]
      %v881 = vld [vmem:[#allocation2 + $0x75] sm:$0xf]
      %v882 = vld [vmem:[#allocation2 + $0x85] sm:$0xf]
      %v883 = vld [vmem:[#allocation2 + $0x95] sm:$0xf]
      %884 = vst [vmem:[#allocation3] sm:$0xf] %v874
      %885 = vst [vmem:[#allocation3 + $0x4] sm:$0xf] %v875
      %886 = vst [vmem:[#allocation3 + $0x8] sm:$0xf] %v876
      %887 = vst [vmem:[#allocation3 + $0xc] sm:$0xf] %v877
      %888 = vst [vmem:[#allocation3 + $0x10] sm:$0xf] %v878
      %889 = vst [vmem:[#allocation3 + $0x14] sm:$0xf] %v879
      %890 = vst [vmem:[#allocation3 + $0x18] sm:$0xf] %v880
      %891 = vst [vmem:[#allocation3 + $0x1c] sm:$0xf] %v881
      %892 = vst [vmem:[#allocation3 + $0x20] sm:$0xf] %v882
      %893 = vst [vmem:[#allocation3 + $0x24] sm:$0xf] %v883
      %v894 = vld [vmem:[%s221 + $0x5] sm:$0x1]
      %v895 = vld [vmem:[#allocation3] sm:$0xf]
      %v896 = vld [vmem:[#allocation3 + $0x4] sm:$0xf]
      %v897 = vld [vmem:[#allocation3 + $0x8] sm:$0xf]
      %v898 = vld [vmem:[#allocation3 + $0xc] sm:$0xf]
      %v899 = vperm.slane %v894, 0
      %v900 = vmul.f32 %v895, %v899
      %v901 = vmul.f32 %v896, %v899
      %v902 = vmul.f32 %v897, %v899
      %v903 = vmul.f32 %v898, %v899
      %v904 = vadd.f32 %v870, %v900
      %v905 = vadd.f32 %v871, %v901
      %v906 = vadd.f32 %v872, %v902
      %v907 = vadd.f32 %v873, %v903
      %v908 = vld [vmem:[%s306 + $0x5] sm:$0x1]
      %v909 = vld [vmem:[%s308] sm:$0xf]
      %v910 = vld [vmem:[%s308 + $0x4] sm:$0xf]
      %v911 = vld [vmem:[%s308 + $0x8] sm:$0xf]
      %v912 = vld [vmem:[%s308 + $0xc] sm:$0xf]
      %v913 = vperm.slane %v908, 0
      %v914 = vmul.f32 %v909, %v913
      %v915 = vmul.f32 %v910, %v913
      %v916 = vmul.f32 %v911, %v913
      %v917 = vmul.f32 %v912, %v913
      %v918 = vadd.f32 %v904, %v914
      %v919 = vadd.f32 %v905, %v915
      %v920 = vadd.f32 %v906, %v916
      %v921 = vadd.f32 %v907, %v917
      %v922 = vld [vmem:[%s322 + $0x5] sm:$0x1]
      %v923 = vld [vmem:[%s324] sm:$0xf]
      %v924 = vld [vmem:[%s324 + $0x4] sm:$0xf]
      %v925 = vld [vmem:[%s324 + $0x8] sm:$0xf]
      %v926 = vld [vmem:[%s324 + $0xc] sm:$0xf]
      %v927 = vperm.slane %v922, 0
      %v928 = vmul.f32 %v923, %v927
      %v929 = vmul.f32 %v924, %v927
      %v930 = vmul.f32 %v925, %v927
      %v931 = vmul.f32 %v926, %v927
      %v932 = vadd.f32 %v918, %v928
      %v933 = vadd.f32 %v919, %v929
      %v934 = vadd.f32 %v920, %v930
      %v935 = vadd.f32 %v921, %v931
      %v936 = vld [vmem:[%s338 + $0x5] sm:$0x1]
      %v937 = vld [vmem:[%s340] sm:$0xf]
      %v938 = vld [vmem:[%s340 + $0x4] sm:$0xf]
      %v939 = vld [vmem:[%s340 + $0x8] sm:$0xf]
      %v940 = vld [vmem:[%s340 + $0xc] sm:$0xf]
      %v941 = vperm.slane %v936, 0
      %v942 = vmul.f32 %v937, %v941
      %v943 = vmul.f32 %v938, %v941
      %v944 = vmul.f32 %v939, %v941
      %v945 = vmul.f32 %v940, %v941
      %v946 = vadd.f32 %v932, %v942
      %v947 = vadd.f32 %v933, %v943
      %v948 = vadd.f32 %v934, %v944
      %v949 = vadd.f32 %v935, %v945
      %v950 = vld [vmem:[%s354 + $0x5] sm:$0x1]
      %v951 = vld [vmem:[%s356] sm:$0xf]
      %v952 = vld [vmem:[%s356 + $0x4] sm:$0xf]
      %v953 = vld [vmem:[%s356 + $0x8] sm:$0xf]
      %v954 = vld [vmem:[%s356 + $0xc] sm:$0xf]
      %v955 = vperm.slane %v950, 0
      %v956 = vmul.f32 %v951, %v955
      %v957 = vmul.f32 %v952, %v955
      %v958 = vmul.f32 %v953, %v955
      %v959 = vmul.f32 %v954, %v955
      %v960 = vadd.f32 %v946, %v956
      %v961 = vadd.f32 %v947, %v957
      %v962 = vadd.f32 %v948, %v958
      %v963 = vadd.f32 %v949, %v959
      %v964 = vld [vmem:[%s370 + $0x5] sm:$0x1]
      %v965 = vld [vmem:[%s372] sm:$0xf]
      %v966 = vld [vmem:[%s372 + $0x4] sm:$0xf]
      %v967 = vld [vmem:[%s372 + $0x8] sm:$0xf]
      %v968 = vld [vmem:[%s372 + $0xc] sm:$0xf]
      %v969 = vperm.slane %v964, 0
      %v970 = vmul.f32 %v965, %v969
      %v971 = vmul.f32 %v966, %v969
      %v972 = vmul.f32 %v967, %v969
      %v973 = vmul.f32 %v968, %v969
      %v974 = vadd.f32 %v960, %v970
      %v975 = vadd.f32 %v961, %v971
      %v976 = vadd.f32 %v962, %v972
      %v977 = vadd.f32 %v963, %v973
      %v978 = vld [vmem:[%s386 + $0x5] sm:$0x1]
      %v979 = vld [vmem:[%s388] sm:$0xf]
      %v980 = vld [vmem:[%s388 + $0x4] sm:$0xf]
      %v981 = vld [vmem:[%s388 + $0x8] sm:$0xf]
      %v982 = vld [vmem:[%s388 + $0xc] sm:$0xf]
      %v983 = vperm.slane %v978, 0
      %v984 = vmul.f32 %v979, %v983
      %v985 = vmul.f32 %v980, %v983
      %v986 = vmul.f32 %v981, %v983
      %v987 = vmul.f32 %v982, %v983
      %v988 = vadd.f32 %v974, %v984
      %v989 = vadd.f32 %v975, %v985
      %v990 = vadd.f32 %v976, %v986
      %v991 = vadd.f32 %v977, %v987
      %v992 = vld [vmem:[#allocation2 + $0x6] sm:$0xf]
      %v993 = vld [vmem:[#allocation2 + $0x16] sm:$0xf]
      %v994 = vld [vmem:[#allocation2 + $0x26] sm:$0xf]
      %v995 = vld [vmem:[#allocation2 + $0x36] sm:$0xf]
      %v996 = vld [vmem:[#allocation2 + $0x46] sm:$0xf]
      %v997 = vld [vmem:[#allocation2 + $0x56] sm:$0xf]
      %v998 = vld [vmem:[#allocation2 + $0x66] sm:$0xf]
      %v999 = vld [vmem:[#allocation2 + $0x76] sm:$0xf]
      %v1000 = vld [vmem:[#allocation2 + $0x86] sm:$0xf]
      %v1001 = vld [vmem:[#allocation2 + $0x96] sm:$0xf]
      %1002 = vst [vmem:[#allocation3] sm:$0xf] %v992
      %1003 = vst [vmem:[#allocation3 + $0x4] sm:$0xf] %v993
      %1004 = vst [vmem:[#allocation3 + $0x8] sm:$0xf] %v994
      %1005 = vst [vmem:[#allocation3 + $0xc] sm:$0xf] %v995
      %1006 = vst [vmem:[#allocation3 + $0x10] sm:$0xf] %v996
      %1007 = vst [vmem:[#allocation3 + $0x14] sm:$0xf] %v997
      %1008 = vst [vmem:[#allocation3 + $0x18] sm:$0xf] %v998
      %1009 = vst [vmem:[#allocation3 + $0x1c] sm:$0xf] %v999
      %1010 = vst [vmem:[#allocation3 + $0x20] sm:$0xf] %v1000
      %1011 = vst [vmem:[#allocation3 + $0x24] sm:$0xf] %v1001
      %v1012 = vld [vmem:[%s221 + $0x6] sm:$0x1]
      %v1013 = vld [vmem:[#allocation3] sm:$0xf]
      %v1014 = vld [vmem:[#allocation3 + $0x4] sm:$0xf]
      %v1015 = vld [vmem:[#allocation3 + $0x8] sm:$0xf]
      %v1016 = vld [vmem:[#allocation3 + $0xc] sm:$0xf]
      %v1017 = vperm.slane %v1012, 0
      %v1018 = vmul.f32 %v1013, %v1017
      %v1019 = vmul.f32 %v1014, %v1017
      %v1020 = vmul.f32 %v1015, %v1017
      %v1021 = vmul.f32 %v1016, %v1017
      %v1022 = vadd.f32 %v988, %v1018
      %v1023 = vadd.f32 %v989, %v1019
      %v1024 = vadd.f32 %v990, %v1020
      %v1025 = vadd.f32 %v991, %v1021
      %v1026 = vld [vmem:[%s306 + $0x6] sm:$0x1]
      %v1027 = vld [vmem:[%s308] sm:$0xf]
      %v1028 = vld [vmem:[%s308 + $0x4] sm:$0xf]
      %v1029 = vld [vmem:[%s308 + $0x8] sm:$0xf]
      %v1030 = vld [vmem:[%s308 + $0xc] sm:$0xf]
      %v1031 = vperm.slane %v1026, 0
      %v1032 = vmul.f32 %v1027, %v1031
      %v1033 = vmul.f32 %v1028, %v1031
      %v1034 = vmul.f32 %v1029, %v1031
      %v1035 = vmul.f32 %v1030, %v1031
      %v1036 = vadd.f32 %v1022, %v1032
      %v1037 = vadd.f32 %v1023, %v1033
      %v1038 = vadd.f32 %v1024, %v1034
      %v1039 = vadd.f32 %v1025, %v1035
      %v1040 = vld [vmem:[%s322 + $0x6] sm:$0x1]
      %v1041 = vld [vmem:[%s324] sm:$0xf]
      %v1042 = vld [vmem:[%s324 + $0x4] sm:$0xf]
      %v1043 = vld [vmem:[%s324 + $0x8] sm:$0xf]
      %v1044 = vld [vmem:[%s324 + $0xc] sm:$0xf]
      %v1045 = vperm.slane %v1040, 0
      %v1046 = vmul.f32 %v1041, %v1045
      %v1047 = vmul.f32 %v1042, %v1045
      %v1048 = vmul.f32 %v1043, %v1045
      %v1049 = vmul.f32 %v1044, %v1045
      %v1050 = vadd.f32 %v1036, %v1046
      %v1051 = vadd.f32 %v1037, %v1047
      %v1052 = vadd.f32 %v1038, %v1048
      %v1053 = vadd.f32 %v1039, %v1049
      %v1054 = vld [vmem:[%s338 + $0x6] sm:$0x1]
      %v1055 = vld [vmem:[%s340] sm:$0xf]
      %v1056 = vld [vmem:[%s340 + $0x4] sm:$0xf]
      %v1057 = vld [vmem:[%s340 + $0x8] sm:$0xf]
      %v1058 = vld [vmem:[%s340 + $0xc] sm:$0xf]
      %v1059 = vperm.slane %v1054, 0
      %v1060 = vmul.f32 %v1055, %v1059
      %v1061 = vmul.f32 %v1056, %v1059
      %v1062 = vmul.f32 %v1057, %v1059
      %v1063 = vmul.f32 %v1058, %v1059
      %v1064 = vadd.f32 %v1050, %v1060
      %v1065 = vadd.f32 %v1051, %v1061
      %v1066 = vadd.f32 %v1052, %v1062
      %v1067 = vadd.f32 %v1053, %v1063
      %v1068 = vld [vmem:[%s354 + $0x6] sm:$0x1]
      %v1069 = vld [vmem:[%s356] sm:$0xf]
      %v1070 = vld [vmem:[%s356 + $0x4] sm:$0xf]
      %v1071 = vld [vmem:[%s356 + $0x8] sm:$0xf]
      %v1072 = vld [vmem:[%s356 + $0xc] sm:$0xf]
      %v1073 = vperm.slane %v1068, 0
      %v1074 = vmul.f32 %v1069, %v1073
      %v1075 = vmul.f32 %v1070, %v1073
      %v1076 = vmul.f32 %v1071, %v1073
      %v1077 = vmul.f32 %v1072, %v1073
      %v1078 = vadd.f32 %v1064, %v1074
      %v1079 = vadd.f32 %v1065, %v1075
      %v1080 = vadd.f32 %v1066, %v1076
      %v1081 = vadd.f32 %v1067, %v1077
      %v1082 = vld [vmem:[%s370 + $0x6] sm:$0x1]
      %v1083 = vld [vmem:[%s372] sm:$0xf]
      %v1084 = vld [vmem:[%s372 + $0x4] sm:$0xf]
      %v1085 = vld [vmem:[%s372 + $0x8] sm:$0xf]
      %v1086 = vld [vmem:[%s372 + $0xc] sm:$0xf]
      %v1087 = vperm.slane %v1082, 0
      %v1088 = vmul.f32 %v1083, %v1087
      %v1089 = vmul.f32 %v1084, %v1087
      %v1090 = vmul.f32 %v1085, %v1087
      %v1091 = vmul.f32 %v1086, %v1087
      %v1092 = vadd.f32 %v1078, %v1088
      %v1093 = vadd.f32 %v1079, %v1089
      %v1094 = vadd.f32 %v1080, %v1090
      %v1095 = vadd.f32 %v1081, %v1091
      %v1096 = vld [vmem:[%s386 + $0x6] sm:$0x1]
      %v1097 = vld [vmem:[%s388] sm:$0xf]
      %v1098 = vld [vmem:[%s388 + $0x4] sm:$0xf]
      %v1099 = vld [vmem:[%s388 + $0x8] sm:$0xf]
      %v1100 = vld [vmem:[%s388 + $0xc] sm:$0xf]
      %v1101 = vperm.slane %v1096, 0
      %v1102 = vmul.f32 %v1097, %v1101
      %v1103 = vmul.f32 %v1098, %v1101
      %v1104 = vmul.f32 %v1099, %v1101
      %v1105 = vmul.f32 %v1100, %v1101
      %v1106 = vadd.f32 %v1092, %v1102
      %v1107 = vadd.f32 %v1093, %v1103
      %v1108 = vadd.f32 %v1094, %v1104
      %v1109 = vadd.f32 %v1095, %v1105
      %1110 = vst [vmem:[%s232 + $0x1] sm:$0xf] %v1106
      %1111 = vst [vmem:[%s232 + $0x5] sm:$0xf] %v1107
      %1112 = vst [vmem:[%s232 + $0x9] sm:$0xf] %v1108
      %1113 = vst [vmem:[%s232 + $0xd] sm:$0xf] %v1109
      %p1114 = scmp.lt.s32.totalorder %s18, 1
      %s1115 = scalar_select %p1114, %s18, 1
      %p1116 = scmp.lt.s32.totalorder %s19, 0
      %s1117 = scalar_select %p1116, %s19, 0
      %s1118 = smul.addr %s1115, 3
      %s1119 = sadd.s32 %s1117, %s1118
      %s1120 = smul.addr %s1119, 8
      %s1121 = scalar_lea.vmem %s3, %s1120
      // Predicated region
      $region33: #{tpu_custom_call.1} parent=31 // pred_check
        %p1122 = pneg %p126
      $region34: #{tpu_custom_call.1} parent=31 // pred_check_branch
        %1124 = sbr.rel (%p1122) target = $region36
      $region35: #{tpu_custom_call.1} parent=31 // pred_region
        _
      $region36: #{tpu_custom_call.1} parent=31 // pred_fallthru
        _
    $region32: #{tpu_custom_call.1} parent=5 // pred_fallthru
      _
    %p1125 = scmp.le.s32.totalorder 2, %s9
    // Predicated region
    $region37: #{tpu_custom_call.1} parent=5 // pred_check
      %p1126 = pneg %p1125
    $region38: #{tpu_custom_call.1} parent=5 // pred_check_branch
      %1128 = sbr.rel (%p1126) target = $region40
    $region39: #{tpu_custom_call.1} parent=5 // pred_region
      %s1129 = ssub.s32 %s9, 2
      // Predicated region
      $region41: #{tpu_custom_call.1} parent=39 // pred_check
        %p1130 = pneg %p132
      $region42: #{tpu_custom_call.1} parent=39 // pred_check_branch
        %1132 = sbr.rel (%p1130) target = $region44
      $region43: #{tpu_custom_call.1} parent=39 // pred_region
        %p1133 = scmp.lt.s32.totalorder %s20, 1
        %s1134 = scalar_select %p1133, %s20, 1
        %p1135 = scmp.lt.s32.totalorder %s21, 0
        %s1136 = scalar_select %p1135, %s21, 0
        %s1137 = smul.addr %s1134, 3
        %s1138 = sadd.s32 %s1136, %s1137
        %s1139 = smul.addr %s1138, 8
        %s1140 = scalar_lea.vmem %s3, %s1139
      $region44: #{tpu_custom_call.1} parent=39 // pred_fallthru
        _
    $region40: #{tpu_custom_call.1} parent=5 // pred_fallthru
      _
  $region6: #{tpu_custom_call.1} parent=0 // loop_footer
    %s13 = sadd.s32 1, %s9
  $region7: #{tpu_custom_call.1} parent=0 // loop_footer_branch
    %8 = sbr.rel target = $region3
  $region8: #{tpu_custom_call.1} parent=0 // loop_exit
    _

</llo_original>
